<compile_context>
chip_gen: v6e
topology: v6e:2x2x1
jax: 0.10.0
libtpu: 0.0.40
codegen_flags: <defaults>
</compile_context>

<pallas_src>
import functools
import math

import numpy as np
import jax
import jax.numpy as jnp
from jax import lax
from jax.experimental import pallas as pl
from jax.experimental.pallas import tpu as pltpu


# ---------------------------------------------------------------------------
# Kernels
# ---------------------------------------------------------------------------

def _pe_fact_kernel(sxg_ref, cxg_ref, syt_ref, cyt_ref, out_ref, *, w, g):
    """Angle-addition kernel: one grid step fills a (2F, tile_h*w) CHW-flat slab.

    sxg_ref, cxg_ref: (F, L) sin/cos of the x-phase, tiled over one group span
                      L = g*w (a multiple of 128 lanes).  VMEM-resident.
    syt_ref, cyt_ref: (1, F, tile_h) sin/cos of the y-phase for this tile's rows.
    out_ref:          (2F, tile_h*w) output tile (sin channels then cos channels).
    """
    two_f, n_tile = out_ref.shape
    f = two_f // 2
    span = g * w                      # lanes per row-group, multiple of 128
    tile_h = n_tile // w
    n_groups = tile_h // g

    sxg = sxg_ref[...]                # (F, span)
    cxg = cxg_ref[...]                # (F, span)
    syt = syt_ref[0]                  # (F, tile_h)
    cyt = cyt_ref[0]                  # (F, tile_h)

    # Lane -> "which of the g rows inside a group span" masks (k = 1..g-1).
    # Group-index independent, so hoisted out of the group loop.
    if g > 1:
        lane = lax.broadcasted_iota(jnp.int32, (f, span), 1)
        masks = [(lane >= k * w) & (lane < (k + 1) * w) for k in range(1, g)]

    # Static unroll over row groups: every slice below has a static start, and
    # every store is full-width (span % 128 == 0) and sublane-aligned.
    for t in range(n_groups):
        sy0 = syt[:, t * g:t * g + 1]                 # (F, 1)
        cy0 = cyt[:, t * g:t * g + 1]
        if g == 1:
            syy, cyy = sy0, cy0                       # rank-1 broadcast in the math
        else:
            syy = jnp.broadcast_to(sy0, (f, span))
            cyy = jnp.broadcast_to(cy0, (f, span))
            for k in range(1, g):
                sk = jnp.broadcast_to(syt[:, t * g + k:t * g + k + 1], (f, span))
                ck = jnp.broadcast_to(cyt[:, t * g + k:t * g + k + 1], (f, span))
                syy = jnp.where(masks[k - 1], sk, syy)
                cyy = jnp.where(masks[k - 1], ck, cyy)
        # sin(ax + by) / cos(ax + by) via angle addition: 3 VPU ops per element.
        out_ref[0:f, t * span:(t + 1) * span] = sxg * cyy + cxg * syy
        out_ref[f:two_f, t * span:(t + 1) * span] = cxg * cyy - sxg * syy


def _pe_direct_kernel(gt_ref, x_ref, y_ref, out_ref):
    """Fallback: direct sin/cos on the full phase (previous kernel, cleaned).

    gt_ref:  (F, 2) frequencies with 2*pi already folded in (col0 = x, col1 = y).
    x_ref:   (1, n_tile) x coordinate per flattened pixel, already in [-1, 1].
    y_ref:   (1, n_tile) y coordinate per flattened pixel, already in [-1, 1].
    out_ref: (2F, n_tile) output tile.
    """
    two_f, _ = out_ref.shape
    f = two_f // 2
    gt = gt_ref[...]                                         # (F, 2)
    phase = gt[:, 0:1] * x_ref[...] + gt[:, 1:2] * y_ref[...]
    out_ref[0:f, :] = jnp.sin(phase)
    out_ref[f:two_f, :] = jnp.cos(phase)


# ---------------------------------------------------------------------------
# Tiling helpers (generation-aware)
# ---------------------------------------------------------------------------

_MAX_GROUP_ROWS = 8          # beyond this the in-kernel select chain is wasteful
_MAX_TILE_BYTES = 8 << 20    # output-tile budget (Pallas double-buffers it)


def _num_tensorcores():
    """2 for v7x-class chips (megacore grid sharding), else 1 (v5e/v6e)."""
    try:
        kind = jax.devices()[0].device_kind.lower()
    except Exception:
        return 1
    return 2 if "v7" in kind else 1


def _pick_tile_h(h, candidates, n_cores):
    """Largest candidate; on 2-TC chips prefer an even (>=2) grid split."""
    if n_cores >= 2:
        for pred in (lambda d: (h // d) >= 2 and (h // d) % 2 == 0,
                     lambda d: (h // d) >= 2):
            pool = [d for d in candidates if pred(d)]
            if pool:
                return max(pool)
    return max(candidates)


def _compiler_params(out_tile_bytes):
    # Cover double-buffered output tiles plus inputs/margin on every generation
    # (32 MiB is within v7x's 64 MiB physical VMEM and v5e/v6e's 128 MiB).
    vmem_limit = int(min(max(32 << 20, 2 * out_tile_bytes + (16 << 20)), 96 << 20))
    return pltpu.CompilerParams(dimension_semantics=("parallel",),
                                vmem_limit_bytes=vmem_limit)


# ---------------------------------------------------------------------------
# Forward wrapper
# ---------------------------------------------------------------------------

def position_embedding_random_forward(gaussian_matrix, size,
                                       max_tile_bytes=_MAX_TILE_BYTES):
    """Pallas equivalent of PositionEmbeddingRandom.forward(size).

    gaussian_matrix: (2, F) float32 buffer (the registered torch buffer).
    size:            (h, w) static ints.
    Returns:         (2F, h, w) float32, matching the PyTorch module.
    """
    h, w = int(size[0]), int(size[1])
    f = int(gaussian_matrix.shape[1])
    two_f = 2 * f
    n_cores = _num_tensorcores()

    g_mat = gaussian_matrix.astype(jnp.float32)
    two_pi = jnp.float32(2.0 * np.pi)
    gx = two_pi * g_mat[0, :]                        # (F,) x frequencies (2*pi folded)
    gy = two_pi * g_mat[1, :]                        # (F,) y frequencies

    # Pixel-center coordinates mapped to [-1, 1].
    x1d = 2.0 * ((jnp.arange(w, dtype=jnp.float32) + 0.5) / w) - 1.0
    y1d = 2.0 * ((jnp.arange(h, dtype=jnp.float32) + 0.5) / h) - 1.0

    # Group span: smallest multiple of 128 lanes that covers whole image rows.
    span = (w * 128) // math.gcd(w, 128)
    g = span // w

    fact_divs = [d for d in range(1, h + 1) if h % d == 0 and d % g == 0]
    use_fact = (g <= _MAX_GROUP_ROWS) and bool(fact_divs)

    if use_fact:
        fits = [d for d in fact_divs if two_f * d * w * 4 <= max_tile_bytes]
        tile_h = _pick_tile_h(h, fits or [min(fact_divs)], n_cores)
        n_tile = tile_h * w
        grid_n = h // tile_h

        # Small sin/cos tables: 2*F*(h+w) transcendentals total, wrapper-side.
        ax = gx[:, None] * x1d[None, :]              # (F, w)  x-phase
        by = gy[:, None] * y1d[None, :]              # (F, h)  y-phase
        sx_g = jnp.tile(jnp.sin(ax), (1, g))         # (F, span), VMEM-resident
        cx_g = jnp.tile(jnp.cos(ax), (1, g))
        # Per-tile y tables: (grid_n, F, tile_h); [i, f, r] = table[f, i*tile_h + r].
        sy_t = jnp.sin(by).reshape(f, grid_n, tile_h).transpose(1, 0, 2)
        cy_t = jnp.cos(by).reshape(f, grid_n, tile_h).transpose(1, 0, 2)

        kernel = functools.partial(_pe_fact_kernel, w=w, g=g)
        pe_flat = pl.pallas_call(
            kernel,
            out_shape=jax.ShapeDtypeStruct((two_f, h * w), jnp.float32),
            grid_spec=pltpu.PrefetchScalarGridSpec(
                num_scalar_prefetch=0,
                grid=(grid_n,),
                in_specs=[
                    pl.BlockSpec((f, span), lambda i: (0, 0)),          # sin(x-phase), resident
                    pl.BlockSpec((f, span), lambda i: (0, 0)),          # cos(x-phase), resident
                    pl.BlockSpec((1, f, tile_h), lambda i: (i, 0, 0)),  # sin(y-phase) tile
                    pl.BlockSpec((1, f, tile_h), lambda i: (i, 0, 0)),  # cos(y-phase) tile
                ],
                out_specs=pl.BlockSpec((two_f, n_tile), lambda i: (0, i)),
            ),
            compiler_params=_compiler_params(two_f * n_tile * 4),
        )(sx_g, cx_g, sy_t, cy_t)
    else:
        # Fallback: direct sin/cos kernel (lane-dense tiles or one full tile).
        divs = [d for d in range(1, h + 1)
                if h % d == 0 and ((d * w) % 128 == 0 or d == h)]
        fits = [d for d in divs if two_f * d * w * 4 <= max_tile_bytes]
        tile_h = _pick_tile_h(h, fits or [min(divs)], n_cores)
        n_tile = tile_h * w
        grid_n = h // tile_h

        gt = jnp.stack([gx, gy], axis=1)             # (F, 2), 2*pi already folded in
        x_flat = jnp.broadcast_to(x1d[None, :], (h, w)).reshape(1, h * w)
        y_flat = jnp.broadcast_to(y1d[:, None], (h, w)).reshape(1, h * w)

        pe_flat = pl.pallas_call(
            _pe_direct_kernel,
            out_shape=jax.ShapeDtypeStruct((two_f, h * w), jnp.float32),
            grid_spec=pltpu.PrefetchScalarGridSpec(
                num_scalar_prefetch=0,
                grid=(grid_n,),
                in_specs=[
                    pl.BlockSpec((f, 2), lambda i: (0, 0)),        # frequencies, resident
                    pl.BlockSpec((1, n_tile), lambda i: (0, i)),   # x coords slab
                    pl.BlockSpec((1, n_tile), lambda i: (0, i)),   # y coords slab
                ],
                out_specs=pl.BlockSpec((two_f, n_tile), lambda i: (0, i)),
            ),
            compiler_params=_compiler_params(two_f * n_tile * 4),
        )(gt, x_flat, y_flat)

    # Already CHW-flat: reshaping (2F, h*w) -> (2F, h, w) is free (row-major).
    return pe_flat.reshape(two_f, h, w)


# ---------------------------------------------------------------------------
# Pure-JAX reference + self-test
# ---------------------------------------------------------------------------

def _reference_forward(gaussian_matrix, size):
    """Pure-JAX reference replicating the PyTorch code line by line."""
    h, w = size
    grid = jnp.ones((h, w), dtype=jnp.float32)
    y_embed = (jnp.cumsum(grid, axis=0) - 0.5) / h
    x_embed = (jnp.cumsum(grid, axis=1) - 0.5) / w
    coords = jnp.stack([x_embed, y_embed], axis=-1)      # (h, w, 2)
    coords = 2.0 * coords - 1.0
    coords = coords @ gaussian_matrix                    # (h, w, F)
    coords = 2.0 * np.pi * coords
    pe = jnp.concatenate([jnp.sin(coords), jnp.cos(coords)], axis=-1)
    return jnp.transpose(pe, (2, 0, 1))                  # (2F, h, w)


if __name__ == "__main__":
    num_pos_feats = 64
    scale = 1.0  # PyTorch: scale=None -> 1.0

    # Deterministic "buffer" init (stands in for scale * torch.randn((2, F))).
    key = jax.random.PRNGKey(0)
    gaussian_matrix = scale * jax.random.normal(
        key, (2, num_pos_feats), dtype=jnp.float32
    )

    # (16,16) and (64,64) exercise the angle-addition kernel (g=8 and g=2);
    # (12,40) exercises the direct fallback kernel (single full tile).
    for (h, w) in [(16, 16), (64, 64), (12, 40)]:
        pe = position_embedding_random_forward(gaussian_matrix, (h, w))
        pe = jax.block_until_ready(pe)
        assert pe.shape == (2 * num_pos_feats, h, w), pe.shape
        assert pe.dtype == jnp.float32

        ref = jax.block_until_ready(_reference_forward(gaussian_matrix, (h, w)))
        # atol covers the one extra rounding step of the angle-addition form
        # (values are all in [-1, 1], so 5e-5 absolute is still a strict check).
        np.testing.assert_allclose(
            np.asarray(pe), np.asarray(ref), rtol=1e-5, atol=5e-5
        )

    print("KERNEL_OK")
</pallas_src>

<mosaic_0001>
module attributes {stable_mosaic.version = 11 : i64} {
  func.func @_pe_fact_kernel(%arg0: i32, %arg1: memref<64x128xf32, #tpu.memory_space<vmem>>, %arg2: memref<64x128xf32, #tpu.memory_space<vmem>>, %arg3: memref<1x64x16xf32, #tpu.memory_space<vmem>>, %arg4: memref<1x64x16xf32, #tpu.memory_space<vmem>>, %arg5: memref<128x256xf32, #tpu.memory_space<vmem>>) attributes {dimension_semantics = [#tpu.dimension_semantics<parallel>], iteration_bounds = array<i64: 1>, scalar_prefetch = 0 : i64, scratch_operands = 0 : i64, tpu.core_type = #tpu.core_type<tc>, window_params = [{pipeline_mode = #tpu.pipeline_mode<synchronous>, transform_indices = @transform_0, window_bounds = array<i64: 64, 128>}, {pipeline_mode = #tpu.pipeline_mode<synchronous>, transform_indices = @transform_1, window_bounds = array<i64: 64, 128>}, {transform_indices = @transform_2, window_bounds = array<i64: 1, 64, 16>}, {transform_indices = @transform_3, window_bounds = array<i64: 1, 64, 16>}, {transform_indices = @transform_4, window_bounds = array<i64: 128, 256>}]} {
    %c0 = arith.constant 0 : index
    %c0_0 = arith.constant 0 : index
    %0 = vector.load %arg1[%c0, %c0_0] : memref<64x128xf32, #tpu.memory_space<vmem>>, vector<64x128xf32>
    %c0_1 = arith.constant 0 : index
    %c0_2 = arith.constant 0 : index
    %1 = vector.load %arg2[%c0_1, %c0_2] : memref<64x128xf32, #tpu.memory_space<vmem>>, vector<64x128xf32>
    %c0_3 = arith.constant 0 : index
    %c0_4 = arith.constant 0 : index
    %c0_5 = arith.constant 0 : index
    %2 = vector.load %arg3[%c0_3, %c0_4, %c0_5] : memref<1x64x16xf32, #tpu.memory_space<vmem>>, vector<1x64x16xf32>
    %3 = vector.shape_cast %2 : vector<1x64x16xf32> to vector<64x16xf32>
    %c0_6 = arith.constant 0 : index
    %c0_7 = arith.constant 0 : index
    %c0_8 = arith.constant 0 : index
    %4 = vector.load %arg4[%c0_6, %c0_7, %c0_8] : memref<1x64x16xf32, #tpu.memory_space<vmem>>, vector<1x64x16xf32>
    %5 = vector.shape_cast %4 : vector<1x64x16xf32> to vector<64x16xf32>
    %6 = tpu.iota {dimensions = array<i32: 1>} : vector<64x128xi32>
    %c16_i32 = arith.constant 16 : i32
    %7 = vector.broadcast %c16_i32 : i32 to vector<64x128xi32>
    %8 = arith.cmpi sge, %6, %7 : vector<64x128xi32>
    %c32_i32 = arith.constant 32 : i32
    %9 = vector.broadcast %c32_i32 : i32 to vector<64x128xi32>
    %10 = arith.cmpi slt, %6, %9 : vector<64x128xi32>
    %11 = arith.andi %8, %10 : vector<64x128xi1>
    %c32_i32_9 = arith.constant 32 : i32
    %12 = vector.broadcast %c32_i32_9 : i32 to vector<64x128xi32>
    %13 = arith.cmpi sge, %6, %12 : vector<64x128xi32>
    %c48_i32 = arith.constant 48 : i32
    %14 = vector.broadcast %c48_i32 : i32 to vector<64x128xi32>
    %15 = arith.cmpi slt, %6, %14 : vector<64x128xi32>
    %16 = arith.andi %13, %15 : vector<64x128xi1>
    %c48_i32_10 = arith.constant 48 : i32
    %17 = vector.broadcast %c48_i32_10 : i32 to vector<64x128xi32>
    %18 = arith.cmpi sge, %6, %17 : vector<64x128xi32>
    %c64_i32 = arith.constant 64 : i32
    %19 = vector.broadcast %c64_i32 : i32 to vector<64x128xi32>
    %20 = arith.cmpi slt, %6, %19 : vector<64x128xi32>
    %21 = arith.andi %18, %20 : vector<64x128xi1>
    %c64_i32_11 = arith.constant 64 : i32
    %22 = vector.broadcast %c64_i32_11 : i32 to vector<64x128xi32>
    %23 = arith.cmpi sge, %6, %22 : vector<64x128xi32>
    %c80_i32 = arith.constant 80 : i32
    %24 = vector.broadcast %c80_i32 : i32 to vector<64x128xi32>
    %25 = arith.cmpi slt, %6, %24 : vector<64x128xi32>
    %26 = arith.andi %23, %25 : vector<64x128xi1>
    %c80_i32_12 = arith.constant 80 : i32
    %27 = vector.broadcast %c80_i32_12 : i32 to vector<64x128xi32>
    %28 = arith.cmpi sge, %6, %27 : vector<64x128xi32>
    %c96_i32 = arith.constant 96 : i32
    %29 = vector.broadcast %c96_i32 : i32 to vector<64x128xi32>
    %30 = arith.cmpi slt, %6, %29 : vector<64x128xi32>
    %31 = arith.andi %28, %30 : vector<64x128xi1>
    %c96_i32_13 = arith.constant 96 : i32
    %32 = vector.broadcast %c96_i32_13 : i32 to vector<64x128xi32>
    %33 = arith.cmpi sge, %6, %32 : vector<64x128xi32>
    %c112_i32 = arith.constant 112 : i32
    %34 = vector.broadcast %c112_i32 : i32 to vector<64x128xi32>
    %35 = arith.cmpi slt, %6, %34 : vector<64x128xi32>
    %36 = arith.andi %33, %35 : vector<64x128xi1>
    %c112_i32_14 = arith.constant 112 : i32
    %37 = vector.broadcast %c112_i32_14 : i32 to vector<64x128xi32>
    %38 = arith.cmpi sge, %6, %37 : vector<64x128xi32>
    %c128_i32 = arith.constant 128 : i32
    %39 = vector.broadcast %c128_i32 : i32 to vector<64x128xi32>
    %40 = arith.cmpi slt, %6, %39 : vector<64x128xi32>
    %41 = arith.andi %38, %40 : vector<64x128xi1>
    %42 = vector.extract_strided_slice %3 {offsets = [0, 0], sizes = [64, 1], strides = [1, 1]} : vector<64x16xf32> to vector<64x1xf32>
    %43 = vector.extract_strided_slice %5 {offsets = [0, 0], sizes = [64, 1], strides = [1, 1]} : vector<64x16xf32> to vector<64x1xf32>
    %44 = vector.shape_cast %42 : vector<64x1xf32> to vector<64x1xf32>
    %45 = vector.broadcast %44 : vector<64x1xf32> to vector<64x128xf32>
    %46 = vector.shape_cast %43 : vector<64x1xf32> to vector<64x1xf32>
    %47 = vector.broadcast %46 : vector<64x1xf32> to vector<64x128xf32>
    %48 = vector.extract_strided_slice %3 {offsets = [0, 1], sizes = [64, 1], strides = [1, 1]} : vector<64x16xf32> to vector<64x1xf32>
    %49 = vector.shape_cast %48 : vector<64x1xf32> to vector<64x1xf32>
    %50 = vector.broadcast %49 : vector<64x1xf32> to vector<64x128xf32>
    %51 = vector.extract_strided_slice %5 {offsets = [0, 1], sizes = [64, 1], strides = [1, 1]} : vector<64x16xf32> to vector<64x1xf32>
    %52 = vector.shape_cast %51 : vector<64x1xf32> to vector<64x1xf32>
    %53 = vector.broadcast %52 : vector<64x1xf32> to vector<64x128xf32>
    %54 = arith.select %11, %50, %45 : vector<64x128xi1>, vector<64x128xf32>
    %55 = arith.select %11, %53, %47 : vector<64x128xi1>, vector<64x128xf32>
    %56 = vector.extract_strided_slice %3 {offsets = [0, 2], sizes = [64, 1], strides = [1, 1]} : vector<64x16xf32> to vector<64x1xf32>
    %57 = vector.shape_cast %56 : vector<64x1xf32> to vector<64x1xf32>
    %58 = vector.broadcast %57 : vector<64x1xf32> to vector<64x128xf32>
    %59 = vector.extract_strided_slice %5 {offsets = [0, 2], sizes = [64, 1], strides = [1, 1]} : vector<64x16xf32> to vector<64x1xf32>
    %60 = vector.shape_cast %59 : vector<64x1xf32> to vector<64x1xf32>
    %61 = vector.broadcast %60 : vector<64x1xf32> to vector<64x128xf32>
    %62 = arith.select %16, %58, %54 : vector<64x128xi1>, vector<64x128xf32>
    %63 = arith.select %16, %61, %55 : vector<64x128xi1>, vector<64x128xf32>
    %64 = vector.extract_strided_slice %3 {offsets = [0, 3], sizes = [64, 1], strides = [1, 1]} : vector<64x16xf32> to vector<64x1xf32>
    %65 = vector.shape_cast %64 : vector<64x1xf32> to vector<64x1xf32>
    %66 = vector.broadcast %65 : vector<64x1xf32> to vector<64x128xf32>
    %67 = vector.extract_strided_slice %5 {offsets = [0, 3], sizes = [64, 1], strides = [1, 1]} : vector<64x16xf32> to vector<64x1xf32>
    %68 = vector.shape_cast %67 : vector<64x1xf32> to vector<64x1xf32>
    %69 = vector.broadcast %68 : vector<64x1xf32> to vector<64x128xf32>
    %70 = arith.select %21, %66, %62 : vector<64x128xi1>, vector<64x128xf32>
    %71 = arith.select %21, %69, %63 : vector<64x128xi1>, vector<64x128xf32>
    %72 = vector.extract_strided_slice %3 {offsets = [0, 4], sizes = [64, 1], strides = [1, 1]} : vector<64x16xf32> to vector<64x1xf32>
    %73 = vector.shape_cast %72 : vector<64x1xf32> to vector<64x1xf32>
    %74 = vector.broadcast %73 : vector<64x1xf32> to vector<64x128xf32>
    %75 = vector.extract_strided_slice %5 {offsets = [0, 4], sizes = [64, 1], strides = [1, 1]} : vector<64x16xf32> to vector<64x1xf32>
    %76 = vector.shape_cast %75 : vector<64x1xf32> to vector<64x1xf32>
    %77 = vector.broadcast %76 : vector<64x1xf32> to vector<64x128xf32>
    %78 = arith.select %26, %74, %70 : vector<64x128xi1>, vector<64x128xf32>
    %79 = arith.select %26, %77, %71 : vector<64x128xi1>, vector<64x128xf32>
    %80 = vector.extract_strided_slice %3 {offsets = [0, 5], sizes = [64, 1], strides = [1, 1]} : vector<64x16xf32> to vector<64x1xf32>
    %81 = vector.shape_cast %80 : vector<64x1xf32> to vector<64x1xf32>
    %82 = vector.broadcast %81 : vector<64x1xf32> to vector<64x128xf32>
    %83 = vector.extract_strided_slice %5 {offsets = [0, 5], sizes = [64, 1], strides = [1, 1]} : vector<64x16xf32> to vector<64x1xf32>
    %84 = vector.shape_cast %83 : vector<64x1xf32> to vector<64x1xf32>
    %85 = vector.broadcast %84 : vector<64x1xf32> to vector<64x128xf32>
    %86 = arith.select %31, %82, %78 : vector<64x128xi1>, vector<64x128xf32>
    %87 = arith.select %31, %85, %79 : vector<64x128xi1>, vector<64x128xf32>
    %88 = vector.extract_strided_slice %3 {offsets = [0, 6], sizes = [64, 1], strides = [1, 1]} : vector<64x16xf32> to vector<64x1xf32>
    %89 = vector.shape_cast %88 : vector<64x1xf32> to vector<64x1xf32>
    %90 = vector.broadcast %89 : vector<64x1xf32> to vector<64x128xf32>
    %91 = vector.extract_strided_slice %5 {offsets = [0, 6], sizes = [64, 1], strides = [1, 1]} : vector<64x16xf32> to vector<64x1xf32>
    %92 = vector.shape_cast %91 : vector<64x1xf32> to vector<64x1xf32>
    %93 = vector.broadcast %92 : vector<64x1xf32> to vector<64x128xf32>
    %94 = arith.select %36, %90, %86 : vector<64x128xi1>, vector<64x128xf32>
    %95 = arith.select %36, %93, %87 : vector<64x128xi1>, vector<64x128xf32>
    %96 = vector.extract_strided_slice %3 {offsets = [0, 7], sizes = [64, 1], strides = [1, 1]} : vector<64x16xf32> to vector<64x1xf32>
    %97 = vector.shape_cast %96 : vector<64x1xf32> to vector<64x1xf32>
    %98 = vector.broadcast %97 : vector<64x1xf32> to vector<64x128xf32>
    %99 = vector.extract_strided_slice %5 {offsets = [0, 7], sizes = [64, 1], strides = [1, 1]} : vector<64x16xf32> to vector<64x1xf32>
    %100 = vector.shape_cast %99 : vector<64x1xf32> to vector<64x1xf32>
    %101 = vector.broadcast %100 : vector<64x1xf32> to vector<64x128xf32>
    %102 = arith.select %41, %98, %94 : vector<64x128xi1>, vector<64x128xf32>
    %103 = arith.select %41, %101, %95 : vector<64x128xi1>, vector<64x128xf32>
    %104 = arith.mulf %0, %103 : vector<64x128xf32>
    %105 = arith.mulf %1, %102 : vector<64x128xf32>
    %106 = arith.addf %104, %105 : vector<64x128xf32>
    %c0_15 = arith.constant 0 : index
    %c0_16 = arith.constant 0 : index
    %107 = vector.load %arg5[%c0_15, %c0_16] : memref<128x256xf32, #tpu.memory_space<vmem>>, vector<64x128xf32>
    tpu.vector_store %arg5[%c0_15, %c0_16], %106 {strides = array<i32>} : memref<128x256xf32, #tpu.memory_space<vmem>>, vector<64x128xf32>,
    %108 = arith.mulf %1, %103 : vector<64x128xf32>
    %109 = arith.mulf %0, %102 : vector<64x128xf32>
    %110 = arith.subf %108, %109 : vector<64x128xf32>
    %c64 = arith.constant 64 : index
    %c0_17 = arith.constant 0 : index
    %111 = vector.load %arg5[%c64, %c0_17] : memref<128x256xf32, #tpu.memory_space<vmem>>, vector<64x128xf32>
    tpu.vector_store %arg5[%c64, %c0_17], %110 {strides = array<i32>} : memref<128x256xf32, #tpu.memory_space<vmem>>, vector<64x128xf32>,
    %112 = vector.extract_strided_slice %3 {offsets = [0, 8], sizes = [64, 1], strides = [1, 1]} : vector<64x16xf32> to vector<64x1xf32>
    %113 = vector.extract_strided_slice %5 {offsets = [0, 8], sizes = [64, 1], strides = [1, 1]} : vector<64x16xf32> to vector<64x1xf32>
    %114 = vector.shape_cast %112 : vector<64x1xf32> to vector<64x1xf32>
    %115 = vector.broadcast %114 : vector<64x1xf32> to vector<64x128xf32>
    %116 = vector.shape_cast %113 : vector<64x1xf32> to vector<64x1xf32>
    %117 = vector.broadcast %116 : vector<64x1xf32> to vector<64x128xf32>
    %118 = vector.extract_strided_slice %3 {offsets = [0, 9], sizes = [64, 1], strides = [1, 1]} : vector<64x16xf32> to vector<64x1xf32>
    %119 = vector.shape_cast %118 : vector<64x1xf32> to vector<64x1xf32>
    %120 = vector.broadcast %119 : vector<64x1xf32> to vector<64x128xf32>
    %121 = vector.extract_strided_slice %5 {offsets = [0, 9], sizes = [64, 1], strides = [1, 1]} : vector<64x16xf32> to vector<64x1xf32>
    %122 = vector.shape_cast %121 : vector<64x1xf32> to vector<64x1xf32>
    %123 = vector.broadcast %122 : vector<64x1xf32> to vector<64x128xf32>
    %124 = arith.select %11, %120, %115 : vector<64x128xi1>, vector<64x128xf32>
    %125 = arith.select %11, %123, %117 : vector<64x128xi1>, vector<64x128xf32>
    %126 = vector.extract_strided_slice %3 {offsets = [0, 10], sizes = [64, 1], strides = [1, 1]} : vector<64x16xf32> to vector<64x1xf32>
    %127 = vector.shape_cast %126 : vector<64x1xf32> to vector<64x1xf32>
    %128 = vector.broadcast %127 : vector<64x1xf32> to vector<64x128xf32>
    %129 = vector.extract_strided_slice %5 {offsets = [0, 10], sizes = [64, 1], strides = [1, 1]} : vector<64x16xf32> to vector<64x1xf32>
    %130 = vector.shape_cast %129 : vector<64x1xf32> to vector<64x1xf32>
    %131 = vector.broadcast %130 : vector<64x1xf32> to vector<64x128xf32>
    %132 = arith.select %16, %128, %124 : vector<64x128xi1>, vector<64x128xf32>
    %133 = arith.select %16, %131, %125 : vector<64x128xi1>, vector<64x128xf32>
    %134 = vector.extract_strided_slice %3 {offsets = [0, 11], sizes = [64, 1], strides = [1, 1]} : vector<64x16xf32> to vector<64x1xf32>
    %135 = vector.shape_cast %134 : vector<64x1xf32> to vector<64x1xf32>
    %136 = vector.broadcast %135 : vector<64x1xf32> to vector<64x128xf32>
    %137 = vector.extract_strided_slice %5 {offsets = [0, 11], sizes = [64, 1], strides = [1, 1]} : vector<64x16xf32> to vector<64x1xf32>
    %138 = vector.shape_cast %137 : vector<64x1xf32> to vector<64x1xf32>
    %139 = vector.broadcast %138 : vector<64x1xf32> to vector<64x128xf32>
    %140 = arith.select %21, %136, %132 : vector<64x128xi1>, vector<64x128xf32>
    %141 = arith.select %21, %139, %133 : vector<64x128xi1>, vector<64x128xf32>
    %142 = vector.extract_strided_slice %3 {offsets = [0, 12], sizes = [64, 1], strides = [1, 1]} : vector<64x16xf32> to vector<64x1xf32>
    %143 = vector.shape_cast %142 : vector<64x1xf32> to vector<64x1xf32>
    %144 = vector.broadcast %143 : vector<64x1xf32> to vector<64x128xf32>
    %145 = vector.extract_strided_slice %5 {offsets = [0, 12], sizes = [64, 1], strides = [1, 1]} : vector<64x16xf32> to vector<64x1xf32>
    %146 = vector.shape_cast %145 : vector<64x1xf32> to vector<64x1xf32>
    %147 = vector.broadcast %146 : vector<64x1xf32> to vector<64x128xf32>
    %148 = arith.select %26, %144, %140 : vector<64x128xi1>, vector<64x128xf32>
    %149 = arith.select %26, %147, %141 : vector<64x128xi1>, vector<64x128xf32>
    %150 = vector.extract_strided_slice %3 {offsets = [0, 13], sizes = [64, 1], strides = [1, 1]} : vector<64x16xf32> to vector<64x1xf32>
    %151 = vector.shape_cast %150 : vector<64x1xf32> to vector<64x1xf32>
    %152 = vector.broadcast %151 : vector<64x1xf32> to vector<64x128xf32>
    %153 = vector.extract_strided_slice %5 {offsets = [0, 13], sizes = [64, 1], strides = [1, 1]} : vector<64x16xf32> to vector<64x1xf32>
    %154 = vector.shape_cast %153 : vector<64x1xf32> to vector<64x1xf32>
    %155 = vector.broadcast %154 : vector<64x1xf32> to vector<64x128xf32>
    %156 = arith.select %31, %152, %148 : vector<64x128xi1>, vector<64x128xf32>
    %157 = arith.select %31, %155, %149 : vector<64x128xi1>, vector<64x128xf32>
    %158 = vector.extract_strided_slice %3 {offsets = [0, 14], sizes = [64, 1], strides = [1, 1]} : vector<64x16xf32> to vector<64x1xf32>
    %159 = vector.shape_cast %158 : vector<64x1xf32> to vector<64x1xf32>
    %160 = vector.broadcast %159 : vector<64x1xf32> to vector<64x128xf32>
    %161 = vector.extract_strided_slice %5 {offsets = [0, 14], sizes = [64, 1], strides = [1, 1]} : vector<64x16xf32> to vector<64x1xf32>
    %162 = vector.shape_cast %161 : vector<64x1xf32> to vector<64x1xf32>
    %163 = vector.broadcast %162 : vector<64x1xf32> to vector<64x128xf32>
    %164 = arith.select %36, %160, %156 : vector<64x128xi1>, vector<64x128xf32>
    %165 = arith.select %36, %163, %157 : vector<64x128xi1>, vector<64x128xf32>
    %166 = vector.extract_strided_slice %3 {offsets = [0, 15], sizes = [64, 1], strides = [1, 1]} : vector<64x16xf32> to vector<64x1xf32>
    %167 = vector.shape_cast %166 : vector<64x1xf32> to vector<64x1xf32>
    %168 = vector.broadcast %167 : vector<64x1xf32> to vector<64x128xf32>
    %169 = vector.extract_strided_slice %5 {offsets = [0, 15], sizes = [64, 1], strides = [1, 1]} : vector<64x16xf32> to vector<64x1xf32>
    %170 = vector.shape_cast %169 : vector<64x1xf32> to vector<64x1xf32>
    %171 = vector.broadcast %170 : vector<64x1xf32> to vector<64x128xf32>
    %172 = arith.select %41, %168, %164 : vector<64x128xi1>, vector<64x128xf32>
    %173 = arith.select %41, %171, %165 : vector<64x128xi1>, vector<64x128xf32>
    %174 = arith.mulf %0, %173 : vector<64x128xf32>
    %175 = arith.mulf %1, %172 : vector<64x128xf32>
    %176 = arith.addf %174, %175 : vector<64x128xf32>
    %c0_18 = arith.constant 0 : index
    %c128 = arith.constant 128 : index
    %177 = vector.load %arg5[%c0_18, %c128] : memref<128x256xf32, #tpu.memory_space<vmem>>, vector<64x128xf32>
    tpu.vector_store %arg5[%c0_18, %c128], %176 {strides = array<i32>} : memref<128x256xf32, #tpu.memory_space<vmem>>, vector<64x128xf32>,
    %178 = arith.mulf %1, %173 : vector<64x128xf32>
    %179 = arith.mulf %0, %172 : vector<64x128xf32>
    %180 = arith.subf %178, %179 : vector<64x128xf32>
    %c64_19 = arith.constant 64 : index
    %c128_20 = arith.constant 128 : index
    %181 = vector.load %arg5[%c64_19, %c128_20] : memref<128x256xf32, #tpu.memory_space<vmem>>, vector<64x128xf32>
    tpu.vector_store %arg5[%c64_19, %c128_20], %180 {strides = array<i32>} : memref<128x256xf32, #tpu.memory_space<vmem>>, vector<64x128xf32>,
    return
  }
  func.func @transform_0(%arg0: i32) -> (i32, i32) {
    %c0_i32 = arith.constant 0 : i32
    %c0_i32_0 = arith.constant 0 : i32
    %c0_i32_1 = arith.constant 0 : i32
    return %c0_i32, %c0_i32_0 : i32, i32
  }
  func.func @transform_1(%arg0: i32) -> (i32, i32) {
    %c0_i32 = arith.constant 0 : i32
    %c0_i32_0 = arith.constant 0 : i32
    %c0_i32_1 = arith.constant 0 : i32
    return %c0_i32, %c0_i32_0 : i32, i32
  }
  func.func @transform_2(%arg0: i32) -> (i32, i32, i32) {
    %c0_i32 = arith.constant 0 : i32
    %c0_i32_0 = arith.constant 0 : i32
    %c0_i32_1 = arith.constant 0 : i32
    return %arg0, %c0_i32, %c0_i32_0 : i32, i32, i32
  }
  func.func @transform_3(%arg0: i32) -> (i32, i32, i32) {
    %c0_i32 = arith.constant 0 : i32
    %c0_i32_0 = arith.constant 0 : i32
    %c0_i32_1 = arith.constant 0 : i32
    return %arg0, %c0_i32, %c0_i32_0 : i32, i32, i32
  }
  func.func @transform_4(%arg0: i32) -> (i32, i32) {
    %c0_i32 = arith.constant 0 : i32
    %c0_i32_0 = arith.constant 0 : i32
    return %c0_i32, %arg0 : i32, i32
  }
}

</mosaic_0001>

<llo_original>
// kernel: tpu_custom_call.1
$region0: #{tpu_custom_call.1}
  #allocation0 [shape = 'u32[]', space=smem, size = 0x4, offset = 0x4, fixed_abs, tag = 'smem constant byte address 0x4 - core index']
  #allocation1 [shape = 'u32[144,128]{1,0:T(1,128)}', space=vmem, size = 0x12000, scoped, tag = 'internal scratch']
  %s0 = inlined_call_operand.vmem [shape: f32[64,128], index: 0, kind: input, shape index: {}]
  %s1 = inlined_call_operand.vmem [shape: f32[64,128], index: 1, kind: input, shape index: {}]
  %s2 = inlined_call_operand.vmem [shape: f32[1,64,16], index: 2, kind: input, shape index: {}]
  %s3 = inlined_call_operand.vmem [shape: f32[1,64,16], index: 3, kind: input, shape index: {}]
  %s4 = inlined_call_operand.hbm [shape: f32[128,256], index: 4, kind: output, shape index: {}]
  %s5 = sld [smem:[#allocation0]]
  $region26: #{tpu_custom_call.1} parent=0
    _
  %s7 = ssub.s32 1, %s5
  %s8 = scalar_select 0, %s7, %s5
  $region1: #{tpu_custom_call.1} parent=0
    #allocation2 [shape = 'u8[131072]{0}', space=vmem, size = 0x20000, scoped, tag = 'output window, operand 0, single buffered']
    #allocation3 [shape = 's32[1]{0}', space=sflag, size = 0x4, scoped, tag = 'scoped memory for tpu_custom_call.1']
    %9 = vsyncpa [#allocation3], 0
    // Predicated region
    $region2: #{tpu_custom_call.1} parent=1 // pred_check
      _
    $region3: #{tpu_custom_call.1} parent=1 // pred_check_branch
      %11 = sbr.rel (0) target = $region5
    $region4: #{tpu_custom_call.1} parent=1 // pred_region
      _
    $region5: #{tpu_custom_call.1} parent=1 // pred_fallthru
      _
    // Predicated region
    $region6: #{tpu_custom_call.1} parent=1 // pred_check
      _
    $region7: #{tpu_custom_call.1} parent=1 // pred_check_branch
      %13 = sbr.rel (0) target = $region9
    $region8: #{tpu_custom_call.1} parent=1 // pred_region
      _
    $region9: #{tpu_custom_call.1} parent=1 // pred_fallthru
      _
    // Predicated region
    $region10: #{tpu_custom_call.1} parent=1 // pred_check
      _
    $region11: #{tpu_custom_call.1} parent=1 // pred_check_branch
      %15 = sbr.rel (0) target = $region13
    $region12: #{tpu_custom_call.1} parent=1 // pred_region
      _
    $region13: #{tpu_custom_call.1} parent=1 // pred_fallthru
      _
    // Predicated region
    $region14: #{tpu_custom_call.1} parent=1 // pred_check
      _
    $region15: #{tpu_custom_call.1} parent=1 // pred_check_branch
      %17 = sbr.rel (0) target = $region17
    $region16: #{tpu_custom_call.1} parent=1 // pred_region
      _
    $region17: #{tpu_custom_call.1} parent=1 // pred_fallthru
      _
    %v18 = vld [vmem:[%s0] sm:$0xff]
    %v19 = vld [vmem:[%s0 + $0x8] sm:$0xff]
    %v20 = vld [vmem:[%s0 + $0x10] sm:$0xff]
    %v21 = vld [vmem:[%s0 + $0x18] sm:$0xff]
    %v22 = vld [vmem:[%s0 + $0x20] sm:$0xff]
    %v23 = vld [vmem:[%s0 + $0x28] sm:$0xff]
    %v24 = vld [vmem:[%s0 + $0x30] sm:$0xff]
    %v25 = vld [vmem:[%s0 + $0x38] sm:$0xff]
    %v26 = vld [vmem:[%s1] sm:$0xff]
    %v27 = vld [vmem:[%s1 + $0x8] sm:$0xff]
    %v28 = vld [vmem:[%s1 + $0x10] sm:$0xff]
    %v29 = vld [vmem:[%s1 + $0x18] sm:$0xff]
    %v30 = vld [vmem:[%s1 + $0x20] sm:$0xff]
    %v31 = vld [vmem:[%s1 + $0x28] sm:$0xff]
    %v32 = vld [vmem:[%s1 + $0x30] sm:$0xff]
    %v33 = vld [vmem:[%s1 + $0x38] sm:$0xff]
    %v34 = vld [vmem:[%s2] sm:$0xff]
    %v35 = vld [vmem:[%s2 + $0x8] sm:$0xff]
    %v36 = vld [vmem:[%s2 + $0x10] sm:$0xff]
    %v37 = vld [vmem:[%s2 + $0x18] sm:$0xff]
    %v38 = vld [vmem:[%s2 + $0x20] sm:$0xff]
    %v39 = vld [vmem:[%s2 + $0x28] sm:$0xff]
    %v40 = vld [vmem:[%s2 + $0x30] sm:$0xff]
    %v41 = vld [vmem:[%s2 + $0x38] sm:$0xff]
    %v42 = vld [vmem:[%s3] sm:$0xff]
    %v43 = vld [vmem:[%s3 + $0x8] sm:$0xff]
    %v44 = vld [vmem:[%s3 + $0x10] sm:$0xff]
    %v45 = vld [vmem:[%s3 + $0x18] sm:$0xff]
    %v46 = vld [vmem:[%s3 + $0x20] sm:$0xff]
    %v47 = vld [vmem:[%s3 + $0x28] sm:$0xff]
    %v48 = vld [vmem:[%s3 + $0x30] sm:$0xff]
    %v49 = vld [vmem:[%s3 + $0x38] sm:$0xff]
    %v50 = vlaneseq
    %v51 = vand.u32 %v50, 127
    %vm52 = vcmp.ge.s32.totalorder %v51, 16
    %vm53 = vcmp.lt.s32.totalorder %v51, 32
    %vm54 = vmand %vm52, %vm53
    %vm55 = vcmp.ge.s32.totalorder %v51, 32
    %vm56 = vcmp.lt.s32.totalorder %v51, 48
    %vm57 = vmand %vm55, %vm56
    %vm58 = vcmp.ge.s32.totalorder %v51, 48
    %vm59 = vcmp.lt.s32.totalorder %v51, 64
    %vm60 = vmand %vm58, %vm59
    %vm61 = vcmp.ge.s32.totalorder %v51, 64
    %vm62 = vcmp.lt.s32.totalorder %v51, 80
    %vm63 = vmand %vm61, %vm62
    %vm64 = vcmp.ge.s32.totalorder %v51, 80
    %vm65 = vcmp.lt.s32.totalorder %v51, 96
    %vm66 = vmand %vm64, %vm65
    %vm67 = vcmp.ge.s32.totalorder %v51, 96
    %vm68 = vcmp.lt.s32.totalorder %v51, 112
    %vm69 = vmand %vm67, %vm68
    %vm70 = vcmp.ge.s32.totalorder %v51, 112
    %vm71 = vcmp.lt.s32.totalorder %v51, 128
    %vm72 = vmand %vm70, %vm71
    %74 = vset.pattern.permute.xlu0 0
    %75 = vperm.xlu0 %74, %v34
    %v76 = vpop.permute.xlu0 %75
    %79 = vset.pattern.permute.xlu0 0
    %80 = vperm.xlu0 %79, %v35
    %v81 = vpop.permute.xlu0 %80
    %84 = vset.pattern.permute.xlu0 0
    %85 = vperm.xlu0 %84, %v36
    %v86 = vpop.permute.xlu0 %85
    %89 = vset.pattern.permute.xlu0 0
    %90 = vperm.xlu0 %89, %v37
    %v91 = vpop.permute.xlu0 %90
    %94 = vset.pattern.permute.xlu0 0
    %95 = vperm.xlu0 %94, %v38
    %v96 = vpop.permute.xlu0 %95
    %99 = vset.pattern.permute.xlu0 0
    %100 = vperm.xlu0 %99, %v39
    %v101 = vpop.permute.xlu0 %100
    %104 = vset.pattern.permute.xlu0 0
    %105 = vperm.xlu0 %104, %v40
    %v106 = vpop.permute.xlu0 %105
    %109 = vset.pattern.permute.xlu0 0
    %110 = vperm.xlu0 %109, %v41
    %v111 = vpop.permute.xlu0 %110
    %114 = vset.pattern.permute.xlu0 0
    %115 = vperm.xlu0 %114, %v42
    %v116 = vpop.permute.xlu0 %115
    %119 = vset.pattern.permute.xlu0 0
    %120 = vperm.xlu0 %119, %v43
    %v121 = vpop.permute.xlu0 %120
    %124 = vset.pattern.permute.xlu0 0
    %125 = vperm.xlu0 %124, %v44
    %v126 = vpop.permute.xlu0 %125
    %129 = vset.pattern.permute.xlu0 0
    %130 = vperm.xlu0 %129, %v45
    %v131 = vpop.permute.xlu0 %130
    %134 = vset.pattern.permute.xlu0 0
    %135 = vperm.xlu0 %134, %v46
    %v136 = vpop.permute.xlu0 %135
    %139 = vset.pattern.permute.xlu0 0
    %140 = vperm.xlu0 %139, %v47
    %v141 = vpop.permute.xlu0 %140
    %144 = vset.pattern.permute.xlu0 0
    %145 = vperm.xlu0 %144, %v48
    %v146 = vpop.permute.xlu0 %145
    %149 = vset.pattern.permute.xlu0 0
    %150 = vperm.xlu0 %149, %v49
    %v151 = vpop.permute.xlu0 %150
    %153 = vset.pattern.permute.xlu0 1
    %154 = vperm.xlu0 %153, %v34
    %v155 = vpop.permute.xlu0 %154
    %157 = vset.pattern.permute.xlu0 1
    %158 = vperm.xlu0 %157, %v35
    %v159 = vpop.permute.xlu0 %158
    %161 = vset.pattern.permute.xlu0 1
    %162 = vperm.xlu0 %161, %v36
    %v163 = vpop.permute.xlu0 %162
    %165 = vset.pattern.permute.xlu0 1
    %166 = vperm.xlu0 %165, %v37
    %v167 = vpop.permute.xlu0 %166
    %169 = vset.pattern.permute.xlu0 1
    %170 = vperm.xlu0 %169, %v38
    %v171 = vpop.permute.xlu0 %170
    %173 = vset.pattern.permute.xlu0 1
    %174 = vperm.xlu0 %173, %v39
    %v175 = vpop.permute.xlu0 %174
    %177 = vset.pattern.permute.xlu0 1
    %178 = vperm.xlu0 %177, %v40
    %v179 = vpop.permute.xlu0 %178
    %181 = vset.pattern.permute.xlu0 1
    %182 = vperm.xlu0 %181, %v41
    %v183 = vpop.permute.xlu0 %182
    %185 = vset.pattern.permute.xlu0 1
    %186 = vperm.xlu0 %185, %v42
    %v187 = vpop.permute.xlu0 %186
    %189 = vset.pattern.permute.xlu0 1
    %190 = vperm.xlu0 %189, %v43
    %v191 = vpop.permute.xlu0 %190
    %193 = vset.pattern.permute.xlu0 1
    %194 = vperm.xlu0 %193, %v44
    %v195 = vpop.permute.xlu0 %194
    %197 = vset.pattern.permute.xlu0 1
    %198 = vperm.xlu0 %197, %v45
    %v199 = vpop.permute.xlu0 %198
    %201 = vset.pattern.permute.xlu0 1
    %202 = vperm.xlu0 %201, %v46
    %v203 = vpop.permute.xlu0 %202
    %205 = vset.pattern.permute.xlu0 1
    %206 = vperm.xlu0 %205, %v47
    %v207 = vpop.permute.xlu0 %206
    %209 = vset.pattern.permute.xlu0 1
    %210 = vperm.xlu0 %209, %v48
    %v211 = vpop.permute.xlu0 %210
    %213 = vset.pattern.permute.xlu0 1
    %214 = vperm.xlu0 %213, %v49
    %v215 = vpop.permute.xlu0 %214
    %v217 = vsel %vm54, %v155, %v76
    %v218 = vsel %vm54, %v159, %v81
    %v219 = vsel %vm54, %v163, %v86
    %v220 = vsel %vm54, %v167, %v91
    %v221 = vsel %vm54, %v171, %v96
    %v222 = vsel %vm54, %v175, %v101
    %v223 = vsel %vm54, %v179, %v106
    %v224 = vsel %vm54, %v183, %v111
    %v225 = vsel %vm54, %v187, %v116
    %v226 = vsel %vm54, %v191, %v121
    %v227 = vsel %vm54, %v195, %v126
    %v228 = vsel %vm54, %v199, %v131
    %v229 = vsel %vm54, %v203, %v136
    %v230 = vsel %vm54, %v207, %v141
    %v231 = vsel %vm54, %v211, %v146
    %v232 = vsel %vm54, %v215, %v151
    %233 = vset.pattern.permute.xlu0 2
    %234 = vperm.xlu0 %233, %v34
    %v235 = vpop.permute.xlu0 %234
    %237 = vset.pattern.permute.xlu0 2
    %238 = vperm.xlu0 %237, %v35
    %v239 = vpop.permute.xlu0 %238
    %241 = vset.pattern.permute.xlu0 2
    %242 = vperm.xlu0 %241, %v36
    %v243 = vpop.permute.xlu0 %242
    %245 = vset.pattern.permute.xlu0 2
    %246 = vperm.xlu0 %245, %v37
    %v247 = vpop.permute.xlu0 %246
    %249 = vset.pattern.permute.xlu0 2
    %250 = vperm.xlu0 %249, %v38
    %v251 = vpop.permute.xlu0 %250
    %253 = vset.pattern.permute.xlu0 2
    %254 = vperm.xlu0 %253, %v39
    %v255 = vpop.permute.xlu0 %254
    %257 = vset.pattern.permute.xlu0 2
    %258 = vperm.xlu0 %257, %v40
    %v259 = vpop.permute.xlu0 %258
    %261 = vset.pattern.permute.xlu0 2
    %262 = vperm.xlu0 %261, %v41
    %v263 = vpop.permute.xlu0 %262
    %265 = vset.pattern.permute.xlu0 2
    %266 = vperm.xlu0 %265, %v42
    %v267 = vpop.permute.xlu0 %266
    %269 = vset.pattern.permute.xlu0 2
    %270 = vperm.xlu0 %269, %v43
    %v271 = vpop.permute.xlu0 %270
    %273 = vset.pattern.permute.xlu0 2
    %274 = vperm.xlu0 %273, %v44
    %v275 = vpop.permute.xlu0 %274
    %277 = vset.pattern.permute.xlu0 2
    %278 = vperm.xlu0 %277, %v45
    %v279 = vpop.permute.xlu0 %278
    %281 = vset.pattern.permute.xlu0 2
    %282 = vperm.xlu0 %281, %v46
    %v283 = vpop.permute.xlu0 %282
    %285 = vset.pattern.permute.xlu0 2
    %286 = vperm.xlu0 %285, %v47
    %v287 = vpop.permute.xlu0 %286
    %289 = vset.pattern.permute.xlu0 2
    %290 = vperm.xlu0 %289, %v48
    %v291 = vpop.permute.xlu0 %290
    %293 = vset.pattern.permute.xlu0 2
    %294 = vperm.xlu0 %293, %v49
    %v295 = vpop.permute.xlu0 %294
    %v297 = vsel %vm57, %v235, %v217
    %v298 = vsel %vm57, %v239, %v218
    %v299 = vsel %vm57, %v243, %v219
    %v300 = vsel %vm57, %v247, %v220
    %v301 = vsel %vm57, %v251, %v221
    %v302 = vsel %vm57, %v255, %v222
    %v303 = vsel %vm57, %v259, %v223
    %v304 = vsel %vm57, %v263, %v224
    %v305 = vsel %vm57, %v267, %v225
    %v306 = vsel %vm57, %v271, %v226
    %v307 = vsel %vm57, %v275, %v227
    %v308 = vsel %vm57, %v279, %v228
    %v309 = vsel %vm57, %v283, %v229
    %v310 = vsel %vm57, %v287, %v230
    %v311 = vsel %vm57, %v291, %v231
    %v312 = vsel %vm57, %v295, %v232
    %313 = vset.pattern.permute.xlu0 3
    %314 = vperm.xlu0 %313, %v34
    %v315 = vpop.permute.xlu0 %314
    %317 = vset.pattern.permute.xlu0 3
    %318 = vperm.xlu0 %317, %v35
    %v319 = vpop.permute.xlu0 %318
    %321 = vset.pattern.permute.xlu0 3
    %322 = vperm.xlu0 %321, %v36
    %v323 = vpop.permute.xlu0 %322
    %325 = vset.pattern.permute.xlu0 3
    %326 = vperm.xlu0 %325, %v37
    %v327 = vpop.permute.xlu0 %326
    %329 = vset.pattern.permute.xlu0 3
    %330 = vperm.xlu0 %329, %v38
    %v331 = vpop.permute.xlu0 %330
    %333 = vset.pattern.permute.xlu0 3
    %334 = vperm.xlu0 %333, %v39
    %v335 = vpop.permute.xlu0 %334
    %337 = vset.pattern.permute.xlu0 3
    %338 = vperm.xlu0 %337, %v40
    %v339 = vpop.permute.xlu0 %338
    %341 = vset.pattern.permute.xlu0 3
    %342 = vperm.xlu0 %341, %v41
    %v343 = vpop.permute.xlu0 %342
    %345 = vset.pattern.permute.xlu0 3
    %346 = vperm.xlu0 %345, %v42
    %v347 = vpop.permute.xlu0 %346
    %349 = vset.pattern.permute.xlu0 3
    %350 = vperm.xlu0 %349, %v43
    %v351 = vpop.permute.xlu0 %350
    %353 = vset.pattern.permute.xlu0 3
    %354 = vperm.xlu0 %353, %v44
    %v355 = vpop.permute.xlu0 %354
    %357 = vset.pattern.permute.xlu0 3
    %358 = vperm.xlu0 %357, %v45
    %v359 = vpop.permute.xlu0 %358
    %361 = vset.pattern.permute.xlu0 3
    %362 = vperm.xlu0 %361, %v46
    %v363 = vpop.permute.xlu0 %362
    %365 = vset.pattern.permute.xlu0 3
    %366 = vperm.xlu0 %365, %v47
    %v367 = vpop.permute.xlu0 %366
    %369 = vset.pattern.permute.xlu0 3
    %370 = vperm.xlu0 %369, %v48
    %v371 = vpop.permute.xlu0 %370
    %373 = vset.pattern.permute.xlu0 3
    %374 = vperm.xlu0 %373, %v49
    %v375 = vpop.permute.xlu0 %374
    %v377 = vsel %vm60, %v315, %v297
    %v378 = vsel %vm60, %v319, %v298
    %v379 = vsel %vm60, %v323, %v299
    %v380 = vsel %vm60, %v327, %v300
    %v381 = vsel %vm60, %v331, %v301
    %v382 = vsel %vm60, %v335, %v302
    %v383 = vsel %vm60, %v339, %v303
    %v384 = vsel %vm60, %v343, %v304
    %v385 = vsel %vm60, %v347, %v305
    %v386 = vsel %vm60, %v351, %v306
    %v387 = vsel %vm60, %v355, %v307
    %v388 = vsel %vm60, %v359, %v308
    %v389 = vsel %vm60, %v363, %v309
    %v390 = vsel %vm60, %v367, %v310
    %v391 = vsel %vm60, %v371, %v311
    %v392 = vsel %vm60, %v375, %v312
    %393 = vset.pattern.permute.xlu0 4
    %394 = vperm.xlu0 %393, %v34
    %v395 = vpop.permute.xlu0 %394
    %397 = vset.pattern.permute.xlu0 4
    %398 = vperm.xlu0 %397, %v35
    %v399 = vpop.permute.xlu0 %398
    %401 = vset.pattern.permute.xlu0 4
    %402 = vperm.xlu0 %401, %v36
    %v403 = vpop.permute.xlu0 %402
    %405 = vset.pattern.permute.xlu0 4
    %406 = vperm.xlu0 %405, %v37
    %v407 = vpop.permute.xlu0 %406
    %409 = vset.pattern.permute.xlu0 4
    %410 = vperm.xlu0 %409, %v38
    %v411 = vpop.permute.xlu0 %410
    %413 = vset.pattern.permute.xlu0 4
    %414 = vperm.xlu0 %413, %v39
    %v415 = vpop.permute.xlu0 %414
    %417 = vset.pattern.permute.xlu0 4
    %418 = vperm.xlu0 %417, %v40
    %v419 = vpop.permute.xlu0 %418
    %421 = vset.pattern.permute.xlu0 4
    %422 = vperm.xlu0 %421, %v41
    %v423 = vpop.permute.xlu0 %422
    %425 = vset.pattern.permute.xlu0 4
    %426 = vperm.xlu0 %425, %v42
    %v427 = vpop.permute.xlu0 %426
    %429 = vset.pattern.permute.xlu0 4
    %430 = vperm.xlu0 %429, %v43
    %v431 = vpop.permute.xlu0 %430
    %433 = vset.pattern.permute.xlu0 4
    %434 = vperm.xlu0 %433, %v44
    %v435 = vpop.permute.xlu0 %434
    %437 = vset.pattern.permute.xlu0 4
    %438 = vperm.xlu0 %437, %v45
    %v439 = vpop.permute.xlu0 %438
    %441 = vset.pattern.permute.xlu0 4
    %442 = vperm.xlu0 %441, %v46
    %v443 = vpop.permute.xlu0 %442
    %445 = vset.pattern.permute.xlu0 4
    %446 = vperm.xlu0 %445, %v47
    %v447 = vpop.permute.xlu0 %446
    %449 = vset.pattern.permute.xlu0 4
    %450 = vperm.xlu0 %449, %v48
    %v451 = vpop.permute.xlu0 %450
    %453 = vset.pattern.permute.xlu0 4
    %454 = vperm.xlu0 %453, %v49
    %v455 = vpop.permute.xlu0 %454
    %v457 = vsel %vm63, %v395, %v377
    %v458 = vsel %vm63, %v399, %v378
    %v459 = vsel %vm63, %v403, %v379
    %v460 = vsel %vm63, %v407, %v380
    %v461 = vsel %vm63, %v411, %v381
    %v462 = vsel %vm63, %v415, %v382
    %v463 = vsel %vm63, %v419, %v383
    %v464 = vsel %vm63, %v423, %v384
    %v465 = vsel %vm63, %v427, %v385
    %v466 = vsel %vm63, %v431, %v386
    %v467 = vsel %vm63, %v435, %v387
    %v468 = vsel %vm63, %v439, %v388
    %v469 = vsel %vm63, %v443, %v389
    %v470 = vsel %vm63, %v447, %v390
    %v471 = vsel %vm63, %v451, %v391
    %v472 = vsel %vm63, %v455, %v392
    %473 = vset.pattern.permute.xlu0 5
    %474 = vperm.xlu0 %473, %v34
    %v475 = vpop.permute.xlu0 %474
    %477 = vset.pattern.permute.xlu0 5
    %478 = vperm.xlu0 %477, %v35
    %v479 = vpop.permute.xlu0 %478
    %481 = vset.pattern.permute.xlu0 5
    %482 = vperm.xlu0 %481, %v36
    %v483 = vpop.permute.xlu0 %482
    %485 = vset.pattern.permute.xlu0 5
    %486 = vperm.xlu0 %485, %v37
    %v487 = vpop.permute.xlu0 %486
    %489 = vset.pattern.permute.xlu0 5
    %490 = vperm.xlu0 %489, %v38
    %v491 = vpop.permute.xlu0 %490
    %493 = vset.pattern.permute.xlu0 5
    %494 = vperm.xlu0 %493, %v39
    %v495 = vpop.permute.xlu0 %494
    %497 = vset.pattern.permute.xlu0 5
    %498 = vperm.xlu0 %497, %v40
    %v499 = vpop.permute.xlu0 %498
    %501 = vset.pattern.permute.xlu0 5
    %502 = vperm.xlu0 %501, %v41
    %v503 = vpop.permute.xlu0 %502
    %505 = vset.pattern.permute.xlu0 5
    %506 = vperm.xlu0 %505, %v42
    %v507 = vpop.permute.xlu0 %506
    %509 = vset.pattern.permute.xlu0 5
    %510 = vperm.xlu0 %509, %v43
    %v511 = vpop.permute.xlu0 %510
    %513 = vset.pattern.permute.xlu0 5
    %514 = vperm.xlu0 %513, %v44
    %v515 = vpop.permute.xlu0 %514
    %517 = vset.pattern.permute.xlu0 5
    %518 = vperm.xlu0 %517, %v45
    %v519 = vpop.permute.xlu0 %518
    %521 = vset.pattern.permute.xlu0 5
    %522 = vperm.xlu0 %521, %v46
    %v523 = vpop.permute.xlu0 %522
    %525 = vset.pattern.permute.xlu0 5
    %526 = vperm.xlu0 %525, %v47
    %v527 = vpop.permute.xlu0 %526
    %529 = vset.pattern.permute.xlu0 5
    %530 = vperm.xlu0 %529, %v48
    %v531 = vpop.permute.xlu0 %530
    %533 = vset.pattern.permute.xlu0 5
    %534 = vperm.xlu0 %533, %v49
    %v535 = vpop.permute.xlu0 %534
    %v537 = vsel %vm66, %v475, %v457
    %v538 = vsel %vm66, %v479, %v458
    %v539 = vsel %vm66, %v483, %v459
    %v540 = vsel %vm66, %v487, %v460
    %v541 = vsel %vm66, %v491, %v461
    %v542 = vsel %vm66, %v495, %v462
    %v543 = vsel %vm66, %v499, %v463
    %v544 = vsel %vm66, %v503, %v464
    %v545 = vsel %vm66, %v507, %v465
    %v546 = vsel %vm66, %v511, %v466
    %v547 = vsel %vm66, %v515, %v467
    %v548 = vsel %vm66, %v519, %v468
    %v549 = vsel %vm66, %v523, %v469
    %v550 = vsel %vm66, %v527, %v470
    %v551 = vsel %vm66, %v531, %v471
    %v552 = vsel %vm66, %v535, %v472
    %553 = vset.pattern.permute.xlu0 6
    %554 = vperm.xlu0 %553, %v34
    %v555 = vpop.permute.xlu0 %554
    %557 = vset.pattern.permute.xlu0 6
    %558 = vperm.xlu0 %557, %v35
    %v559 = vpop.permute.xlu0 %558
    %561 = vset.pattern.permute.xlu0 6
    %562 = vperm.xlu0 %561, %v36
    %v563 = vpop.permute.xlu0 %562
    %565 = vset.pattern.permute.xlu0 6
    %566 = vperm.xlu0 %565, %v37
    %v567 = vpop.permute.xlu0 %566
    %569 = vset.pattern.permute.xlu0 6
    %570 = vperm.xlu0 %569, %v38
    %v571 = vpop.permute.xlu0 %570
    %573 = vset.pattern.permute.xlu0 6
    %574 = vperm.xlu0 %573, %v39
    %v575 = vpop.permute.xlu0 %574
    %577 = vset.pattern.permute.xlu0 6
    %578 = vperm.xlu0 %577, %v40
    %v579 = vpop.permute.xlu0 %578
    %581 = vset.pattern.permute.xlu0 6
    %582 = vperm.xlu0 %581, %v41
    %v583 = vpop.permute.xlu0 %582
    %585 = vset.pattern.permute.xlu0 6
    %586 = vperm.xlu0 %585, %v42
    %v587 = vpop.permute.xlu0 %586
    %589 = vset.pattern.permute.xlu0 6
    %590 = vperm.xlu0 %589, %v43
    %v591 = vpop.permute.xlu0 %590
    %593 = vset.pattern.permute.xlu0 6
    %594 = vperm.xlu0 %593, %v44
    %v595 = vpop.permute.xlu0 %594
    %597 = vset.pattern.permute.xlu0 6
    %598 = vperm.xlu0 %597, %v45
    %v599 = vpop.permute.xlu0 %598
    %601 = vset.pattern.permute.xlu0 6
    %602 = vperm.xlu0 %601, %v46
    %v603 = vpop.permute.xlu0 %602
    %605 = vset.pattern.permute.xlu0 6
    %606 = vperm.xlu0 %605, %v47
    %v607 = vpop.permute.xlu0 %606
    %609 = vset.pattern.permute.xlu0 6
    %610 = vperm.xlu0 %609, %v48
    %v611 = vpop.permute.xlu0 %610
    %613 = vset.pattern.permute.xlu0 6
    %614 = vperm.xlu0 %613, %v49
    %v615 = vpop.permute.xlu0 %614
    %v617 = vsel %vm69, %v555, %v537
    %v618 = vsel %vm69, %v559, %v538
    %v619 = vsel %vm69, %v563, %v539
    %v620 = vsel %vm69, %v567, %v540
    %v621 = vsel %vm69, %v571, %v541
    %v622 = vsel %vm69, %v575, %v542
    %v623 = vsel %vm69, %v579, %v543
    %v624 = vsel %vm69, %v583, %v544
    %v625 = vsel %vm69, %v587, %v545
    %v626 = vsel %vm69, %v591, %v546
    %v627 = vsel %vm69, %v595, %v547
    %v628 = vsel %vm69, %v599, %v548
    %v629 = vsel %vm69, %v603, %v549
    %v630 = vsel %vm69, %v607, %v550
    %v631 = vsel %vm69, %v611, %v551
    %v632 = vsel %vm69, %v615, %v552
    %633 = vset.pattern.permute.xlu0 7
    %634 = vperm.xlu0 %633, %v34
    %v635 = vpop.permute.xlu0 %634
    %637 = vset.pattern.permute.xlu0 7
    %638 = vperm.xlu0 %637, %v35
    %v639 = vpop.permute.xlu0 %638
    %641 = vset.pattern.permute.xlu0 7
    %642 = vperm.xlu0 %641, %v36
    %v643 = vpop.permute.xlu0 %642
    %645 = vset.pattern.permute.xlu0 7
    %646 = vperm.xlu0 %645, %v37
    %v647 = vpop.permute.xlu0 %646
    %649 = vset.pattern.permute.xlu0 7
    %650 = vperm.xlu0 %649, %v38
    %v651 = vpop.permute.xlu0 %650
    %653 = vset.pattern.permute.xlu0 7
    %654 = vperm.xlu0 %653, %v39
    %v655 = vpop.permute.xlu0 %654
    %657 = vset.pattern.permute.xlu0 7
    %658 = vperm.xlu0 %657, %v40
    %v659 = vpop.permute.xlu0 %658
    %661 = vset.pattern.permute.xlu0 7
    %662 = vperm.xlu0 %661, %v41
    %v663 = vpop.permute.xlu0 %662
    %665 = vset.pattern.permute.xlu0 7
    %666 = vperm.xlu0 %665, %v42
    %v667 = vpop.permute.xlu0 %666
    %669 = vset.pattern.permute.xlu0 7
    %670 = vperm.xlu0 %669, %v43
    %v671 = vpop.permute.xlu0 %670
    %673 = vset.pattern.permute.xlu0 7
    %674 = vperm.xlu0 %673, %v44
    %v675 = vpop.permute.xlu0 %674
    %677 = vset.pattern.permute.xlu0 7
    %678 = vperm.xlu0 %677, %v45
    %v679 = vpop.permute.xlu0 %678
    %681 = vset.pattern.permute.xlu0 7
    %682 = vperm.xlu0 %681, %v46
    %v683 = vpop.permute.xlu0 %682
    %685 = vset.pattern.permute.xlu0 7
    %686 = vperm.xlu0 %685, %v47
    %v687 = vpop.permute.xlu0 %686
    %689 = vset.pattern.permute.xlu0 7
    %690 = vperm.xlu0 %689, %v48
    %v691 = vpop.permute.xlu0 %690
    %693 = vset.pattern.permute.xlu0 7
    %694 = vperm.xlu0 %693, %v49
    %v695 = vpop.permute.xlu0 %694
    %v697 = vsel %vm72, %v635, %v617
    %v698 = vsel %vm72, %v639, %v618
    %v699 = vsel %vm72, %v643, %v619
    %v700 = vsel %vm72, %v647, %v620
    %v701 = vsel %vm72, %v651, %v621
    %v702 = vsel %vm72, %v655, %v622
    %v703 = vsel %vm72, %v659, %v623
    %v704 = vsel %vm72, %v663, %v624
    %v705 = vsel %vm72, %v667, %v625
    %v706 = vsel %vm72, %v671, %v626
    %v707 = vsel %vm72, %v675, %v627
    %v708 = vsel %vm72, %v679, %v628
    %v709 = vsel %vm72, %v683, %v629
    %v710 = vsel %vm72, %v687, %v630
    %v711 = vsel %vm72, %v691, %v631
    %v712 = vsel %vm72, %v695, %v632
    %v713 = vmul.f32 %v18, %v705
    %v714 = vmul.f32 %v19, %v706
    %v715 = vmul.f32 %v20, %v707
    %v716 = vmul.f32 %v21, %v708
    %v717 = vmul.f32 %v22, %v709
    %v718 = vmul.f32 %v23, %v710
    %v719 = vmul.f32 %v24, %v711
    %v720 = vmul.f32 %v25, %v712
    %v721 = vmul.f32 %v26, %v697
    %v722 = vmul.f32 %v27, %v698
    %v723 = vmul.f32 %v28, %v699
    %v724 = vmul.f32 %v29, %v700
    %v725 = vmul.f32 %v30, %v701
    %v726 = vmul.f32 %v31, %v702
    %v727 = vmul.f32 %v32, %v703
    %v728 = vmul.f32 %v33, %v704
    %v729 = vadd.f32 %v713, %v721
    %v730 = vadd.f32 %v714, %v722
    %v731 = vadd.f32 %v715, %v723
    %v732 = vadd.f32 %v716, %v724
    %v733 = vadd.f32 %v717, %v725
    %v734 = vadd.f32 %v718, %v726
    %v735 = vadd.f32 %v719, %v727
    %v736 = vadd.f32 %v720, %v728
    %737 = vst [vmem:[#allocation2] sm:$0xff] %v729
    %738 = vst [vmem:[#allocation2 + $0x10] sm:$0xff] %v730
    %739 = vst [vmem:[#allocation2 + $0x20] sm:$0xff] %v731
    %740 = vst [vmem:[#allocation2 + $0x30] sm:$0xff] %v732
    %741 = vst [vmem:[#allocation2 + $0x40] sm:$0xff] %v733
    %742 = vst [vmem:[#allocation2 + $0x50] sm:$0xff] %v734
    %743 = vst [vmem:[#allocation2 + $0x60] sm:$0xff] %v735
    %744 = vst [vmem:[#allocation2 + $0x70] sm:$0xff] %v736
    %v745 = vmul.f32 %v26, %v705
    %v746 = vmul.f32 %v27, %v706
    %v747 = vmul.f32 %v28, %v707
    %v748 = vmul.f32 %v29, %v708
    %v749 = vmul.f32 %v30, %v709
    %v750 = vmul.f32 %v31, %v710
    %v751 = vmul.f32 %v32, %v711
    %v752 = vmul.f32 %v33, %v712
    %v753 = vmul.f32 %v18, %v697
    %v754 = vmul.f32 %v19, %v698
    %v755 = vmul.f32 %v20, %v699
    %v756 = vmul.f32 %v21, %v700
    %v757 = vmul.f32 %v22, %v701
    %v758 = vmul.f32 %v23, %v702
    %v759 = vmul.f32 %v24, %v703
    %v760 = vmul.f32 %v25, %v704
    %v761 = vsub.f32 %v745, %v753
    %v762 = vsub.f32 %v746, %v754
    %v763 = vsub.f32 %v747, %v755
    %v764 = vsub.f32 %v748, %v756
    %v765 = vsub.f32 %v749, %v757
    %v766 = vsub.f32 %v750, %v758
    %v767 = vsub.f32 %v751, %v759
    %v768 = vsub.f32 %v752, %v760
    %769 = vst [vmem:[#allocation2 + $0x80] sm:$0xff] %v761
    %770 = vst [vmem:[#allocation2 + $0x90] sm:$0xff] %v762
    %771 = vst [vmem:[#allocation2 + $0xa0] sm:$0xff] %v763
    %772 = vst [vmem:[#allocation2 + $0xb0] sm:$0xff] %v764
    %773 = vst [vmem:[#allocation2 + $0xc0] sm:$0xff] %v765
    %774 = vst [vmem:[#allocation2 + $0xd0] sm:$0xff] %v766
    %775 = vst [vmem:[#allocation2 + $0xe0] sm:$0xff] %v767
    %776 = vst [vmem:[#allocation2 + $0xf0] sm:$0xff] %v768
    %777 = vset.pattern.permute.xlu0 8
    %778 = vperm.xlu0 %777, %v34
    %v779 = vpop.permute.xlu0 %778
    %781 = vset.pattern.permute.xlu0 8
    %782 = vperm.xlu0 %781, %v35
    %v783 = vpop.permute.xlu0 %782
    %785 = vset.pattern.permute.xlu0 8
    %786 = vperm.xlu0 %785, %v36
    %v787 = vpop.permute.xlu0 %786
    %789 = vset.pattern.permute.xlu0 8
    %790 = vperm.xlu0 %789, %v37
    %v791 = vpop.permute.xlu0 %790
    %793 = vset.pattern.permute.xlu0 8
    %794 = vperm.xlu0 %793, %v38
    %v795 = vpop.permute.xlu0 %794
    %797 = vset.pattern.permute.xlu0 8
    %798 = vperm.xlu0 %797, %v39
    %v799 = vpop.permute.xlu0 %798
    %801 = vset.pattern.permute.xlu0 8
    %802 = vperm.xlu0 %801, %v40
    %v803 = vpop.permute.xlu0 %802
    %805 = vset.pattern.permute.xlu0 8
    %806 = vperm.xlu0 %805, %v41
    %v807 = vpop.permute.xlu0 %806
    %809 = vset.pattern.permute.xlu0 8
    %810 = vperm.xlu0 %809, %v42
    %v811 = vpop.permute.xlu0 %810
    %813 = vset.pattern.permute.xlu0 8
    %814 = vperm.xlu0 %813, %v43
    %v815 = vpop.permute.xlu0 %814
    %817 = vset.pattern.permute.xlu0 8
    %818 = vperm.xlu0 %817, %v44
    %v819 = vpop.permute.xlu0 %818
    %821 = vset.pattern.permute.xlu0 8
    %822 = vperm.xlu0 %821, %v45
    %v823 = vpop.permute.xlu0 %822
    %825 = vset.pattern.permute.xlu0 8
    %826 = vperm.xlu0 %825, %v46
    %v827 = vpop.permute.xlu0 %826
    %829 = vset.pattern.permute.xlu0 8
    %830 = vperm.xlu0 %829, %v47
    %v831 = vpop.permute.xlu0 %830
    %833 = vset.pattern.permute.xlu0 8
    %834 = vperm.xlu0 %833, %v48
    %v835 = vpop.permute.xlu0 %834
    %837 = vset.pattern.permute.xlu0 8
    %838 = vperm.xlu0 %837, %v49
    %v839 = vpop.permute.xlu0 %838
    %841 = vset.pattern.permute.xlu0 9
    %842 = vperm.xlu0 %841, %v34
    %v843 = vpop.permute.xlu0 %842
    %845 = vset.pattern.permute.xlu0 9
    %846 = vperm.xlu0 %845, %v35
    %v847 = vpop.permute.xlu0 %846
    %849 = vset.pattern.permute.xlu0 9
    %850 = vperm.xlu0 %849, %v36
    %v851 = vpop.permute.xlu0 %850
    %853 = vset.pattern.permute.xlu0 9
    %854 = vperm.xlu0 %853, %v37
    %v855 = vpop.permute.xlu0 %854
    %857 = vset.pattern.permute.xlu0 9
    %858 = vperm.xlu0 %857, %v38
    %v859 = vpop.permute.xlu0 %858
    %861 = vset.pattern.permute.xlu0 9
    %862 = vperm.xlu0 %861, %v39
    %v863 = vpop.permute.xlu0 %862
    %865 = vset.pattern.permute.xlu0 9
    %866 = vperm.xlu0 %865, %v40
    %v867 = vpop.permute.xlu0 %866
    %869 = vset.pattern.permute.xlu0 9
    %870 = vperm.xlu0 %869, %v41
    %v871 = vpop.permute.xlu0 %870
    %873 = vset.pattern.permute.xlu0 9
    %874 = vperm.xlu0 %873, %v42
    %v875 = vpop.permute.xlu0 %874
    %877 = vset.pattern.permute.xlu0 9
    %878 = vperm.xlu0 %877, %v43
    %v879 = vpop.permute.xlu0 %878
    %881 = vset.pattern.permute.xlu0 9
    %882 = vperm.xlu0 %881, %v44
    %v883 = vpop.permute.xlu0 %882
    %885 = vset.pattern.permute.xlu0 9
    %886 = vperm.xlu0 %885, %v45
    %v887 = vpop.permute.xlu0 %886
    %889 = vset.pattern.permute.xlu0 9
    %890 = vperm.xlu0 %889, %v46
    %v891 = vpop.permute.xlu0 %890
    %893 = vset.pattern.permute.xlu0 9
    %894 = vperm.xlu0 %893, %v47
    %v895 = vpop.permute.xlu0 %894
    %897 = vset.pattern.permute.xlu0 9
    %898 = vperm.xlu0 %897, %v48
    %v899 = vpop.permute.xlu0 %898
    %901 = vset.pattern.permute.xlu0 9
    %902 = vperm.xlu0 %901, %v49
    %v903 = vpop.permute.xlu0 %902
    %v905 = vsel %vm54, %v843, %v779
    %v906 = vsel %vm54, %v847, %v783
    %v907 = vsel %vm54, %v851, %v787
    %v908 = vsel %vm54, %v855, %v791
    %v909 = vsel %vm54, %v859, %v795
    %v910 = vsel %vm54, %v863, %v799
    %v911 = vsel %vm54, %v867, %v803
    %v912 = vsel %vm54, %v871, %v807
    %v913 = vsel %vm54, %v875, %v811
    %v914 = vsel %vm54, %v879, %v815
    %v915 = vsel %vm54, %v883, %v819
    %v916 = vsel %vm54, %v887, %v823
    %v917 = vsel %vm54, %v891, %v827
    %v918 = vsel %vm54, %v895, %v831
    %v919 = vsel %vm54, %v899, %v835
    %v920 = vsel %vm54, %v903, %v839
    %921 = vset.pattern.permute.xlu0 10
    %922 = vperm.xlu0 %921, %v34
    %v923 = vpop.permute.xlu0 %922
    %925 = vset.pattern.permute.xlu0 10
    %926 = vperm.xlu0 %925, %v35
    %v927 = vpop.permute.xlu0 %926
    %929 = vset.pattern.permute.xlu0 10
    %930 = vperm.xlu0 %929, %v36
    %v931 = vpop.permute.xlu0 %930
    %933 = vset.pattern.permute.xlu0 10
    %934 = vperm.xlu0 %933, %v37
    %v935 = vpop.permute.xlu0 %934
    %937 = vset.pattern.permute.xlu0 10
    %938 = vperm.xlu0 %937, %v38
    %v939 = vpop.permute.xlu0 %938
    %941 = vset.pattern.permute.xlu0 10
    %942 = vperm.xlu0 %941, %v39
    %v943 = vpop.permute.xlu0 %942
    %945 = vset.pattern.permute.xlu0 10
    %946 = vperm.xlu0 %945, %v40
    %v947 = vpop.permute.xlu0 %946
    %949 = vset.pattern.permute.xlu0 10
    %950 = vperm.xlu0 %949, %v41
    %v951 = vpop.permute.xlu0 %950
    %953 = vset.pattern.permute.xlu0 10
    %954 = vperm.xlu0 %953, %v42
    %v955 = vpop.permute.xlu0 %954
    %957 = vset.pattern.permute.xlu0 10
    %958 = vperm.xlu0 %957, %v43
    %v959 = vpop.permute.xlu0 %958
    %961 = vset.pattern.permute.xlu0 10
    %962 = vperm.xlu0 %961, %v44
    %v963 = vpop.permute.xlu0 %962
    %965 = vset.pattern.permute.xlu0 10
    %966 = vperm.xlu0 %965, %v45
    %v967 = vpop.permute.xlu0 %966
    %969 = vset.pattern.permute.xlu0 10
    %970 = vperm.xlu0 %969, %v46
    %v971 = vpop.permute.xlu0 %970
    %973 = vset.pattern.permute.xlu0 10
    %974 = vperm.xlu0 %973, %v47
    %v975 = vpop.permute.xlu0 %974
    %977 = vset.pattern.permute.xlu0 10
    %978 = vperm.xlu0 %977, %v48
    %v979 = vpop.permute.xlu0 %978
    %981 = vset.pattern.permute.xlu0 10
    %982 = vperm.xlu0 %981, %v49
    %v983 = vpop.permute.xlu0 %982
    %v985 = vsel %vm57, %v923, %v905
    %v986 = vsel %vm57, %v927, %v906
    %v987 = vsel %vm57, %v931, %v907
    %v988 = vsel %vm57, %v935, %v908
    %v989 = vsel %vm57, %v939, %v909
    %v990 = vsel %vm57, %v943, %v910
    %v991 = vsel %vm57, %v947, %v911
    %v992 = vsel %vm57, %v951, %v912
    %v993 = vsel %vm57, %v955, %v913
    %v994 = vsel %vm57, %v959, %v914
    %v995 = vsel %vm57, %v963, %v915
    %v996 = vsel %vm57, %v967, %v916
    %v997 = vsel %vm57, %v971, %v917
    %v998 = vsel %vm57, %v975, %v918
    %v999 = vsel %vm57, %v979, %v919
    %v1000 = vsel %vm57, %v983, %v920
    %1001 = vset.pattern.permute.xlu0 11
    %1002 = vperm.xlu0 %1001, %v34
    %v1003 = vpop.permute.xlu0 %1002
    %1005 = vset.pattern.permute.xlu0 11
    %1006 = vperm.xlu0 %1005, %v35
    %v1007 = vpop.permute.xlu0 %1006
    %1009 = vset.pattern.permute.xlu0 11
    %1010 = vperm.xlu0 %1009, %v36
    %v1011 = vpop.permute.xlu0 %1010
    %1013 = vset.pattern.permute.xlu0 11
    %1014 = vperm.xlu0 %1013, %v37
    %v1015 = vpop.permute.xlu0 %1014
    %1017 = vset.pattern.permute.xlu0 11
    %1018 = vperm.xlu0 %1017, %v38
    %v1019 = vpop.permute.xlu0 %1018
    %1021 = vset.pattern.permute.xlu0 11
    %1022 = vperm.xlu0 %1021, %v39
    %v1023 = vpop.permute.xlu0 %1022
    %1025 = vset.pattern.permute.xlu0 11
    %1026 = vperm.xlu0 %1025, %v40
    %v1027 = vpop.permute.xlu0 %1026
    %1029 = vset.pattern.permute.xlu0 11
    %1030 = vperm.xlu0 %1029, %v41
    %v1031 = vpop.permute.xlu0 %1030
    %1033 = vset.pattern.permute.xlu0 11
    %1034 = vperm.xlu0 %1033, %v42
    %v1035 = vpop.permute.xlu0 %1034
    %1037 = vset.pattern.permute.xlu0 11
    %1038 = vperm.xlu0 %1037, %v43
    %v1039 = vpop.permute.xlu0 %1038
    %1041 = vset.pattern.permute.xlu0 11
    %1042 = vperm.xlu0 %1041, %v44
    %v1043 = vpop.permute.xlu0 %1042
    %1045 = vset.pattern.permute.xlu0 11
    %1046 = vperm.xlu0 %1045, %v45
    %v1047 = vpop.permute.xlu0 %1046
    %1049 = vset.pattern.permute.xlu0 11
    %1050 = vperm.xlu0 %1049, %v46
    %v1051 = vpop.permute.xlu0 %1050
    %1053 = vset.pattern.permute.xlu0 11
    %1054 = vperm.xlu0 %1053, %v47
    %v1055 = vpop.permute.xlu0 %1054
    %1057 = vset.pattern.permute.xlu0 11
    %1058 = vperm.xlu0 %1057, %v48
    %v1059 = vpop.permute.xlu0 %1058
    %1061 = vset.pattern.permute.xlu0 11
    %1062 = vperm.xlu0 %1061, %v49
    %v1063 = vpop.permute.xlu0 %1062
    %v1065 = vsel %vm60, %v1003, %v985
    %v1066 = vsel %vm60, %v1007, %v986
    %v1067 = vsel %vm60, %v1011, %v987
    %v1068 = vsel %vm60, %v1015, %v988
    %v1069 = vsel %vm60, %v1019, %v989
    %v1070 = vsel %vm60, %v1023, %v990
    %v1071 = vsel %vm60, %v1027, %v991
    %v1072 = vsel %vm60, %v1031, %v992
    %v1073 = vsel %vm60, %v1035, %v993
    %v1074 = vsel %vm60, %v1039, %v994
    %v1075 = vsel %vm60, %v1043, %v995
    %v1076 = vsel %vm60, %v1047, %v996
    %v1077 = vsel %vm60, %v1051, %v997
    %v1078 = vsel %vm60, %v1055, %v998
    %v1079 = vsel %vm60, %v1059, %v999
    %v1080 = vsel %vm60, %v1063, %v1000
    %1081 = vset.pattern.permute.xlu0 12
    %1082 = vperm.xlu0 %1081, %v34
    %v1083 = vpop.permute.xlu0 %1082
    %1085 = vset.pattern.permute.xlu0 12
    %1086 = vperm.xlu0 %1085, %v35
    %v1087 = vpop.permute.xlu0 %1086
    %1089 = vset.pattern.permute.xlu0 12
    %1090 = vperm.xlu0 %1089, %v36
    %v1091 = vpop.permute.xlu0 %1090
    %1093 = vset.pattern.permute.xlu0 12
    %1094 = vperm.xlu0 %1093, %v37
    %v1095 = vpop.permute.xlu0 %1094
    %1097 = vset.pattern.permute.xlu0 12
    %1098 = vperm.xlu0 %1097, %v38
    %v1099 = vpop.permute.xlu0 %1098
    %1101 = vset.pattern.permute.xlu0 12
    %1102 = vperm.xlu0 %1101, %v39
    %v1103 = vpop.permute.xlu0 %1102
    %1105 = vset.pattern.permute.xlu0 12
    %1106 = vperm.xlu0 %1105, %v40
    %v1107 = vpop.permute.xlu0 %1106
    %1109 = vset.pattern.permute.xlu0 12
    %1110 = vperm.xlu0 %1109, %v41
    %v1111 = vpop.permute.xlu0 %1110
    %1113 = vset.pattern.permute.xlu0 12
    %1114 = vperm.xlu0 %1113, %v42
    %v1115 = vpop.permute.xlu0 %1114
    %1117 = vset.pattern.permute.xlu0 12
    %1118 = vperm.xlu0 %1117, %v43
    %v1119 = vpop.permute.xlu0 %1118
    %1121 = vset.pattern.permute.xlu0 12
    %1122 = vperm.xlu0 %1121, %v44
    %v1123 = vpop.permute.xlu0 %1122
    %1125 = vset.pattern.permute.xlu0 12
    %1126 = vperm.xlu0 %1125, %v45
    %v1127 = vpop.permute.xlu0 %1126
    %1129 = vset.pattern.permute.xlu0 12
    %1130 = vperm.xlu0 %1129, %v46
    %v1131 = vpop.permute.xlu0 %1130
    %1133 = vset.pattern.permute.xlu0 12
    %1134 = vperm.xlu0 %1133, %v47
    %v1135 = vpop.permute.xlu0 %1134
    %1137 = vset.pattern.permute.xlu0 12
    %1138 = vperm.xlu0 %1137, %v48
    %v1139 = vpop.permute.xlu0 %1138
    %1141 = vset.pattern.permute.xlu0 12
    %1142 = vperm.xlu0 %1141, %v49
    %v1143 = vpop.permute.xlu0 %1142
    %v1145 = vsel %vm63, %v1083, %v1065
    %v1146 = vsel %vm63, %v1087, %v1066
    %v1147 = vsel %vm63, %v1091, %v1067
    %v1148 = vsel %vm63, %v1095, %v1068
    %v1149 = vsel %vm63, %v1099, %v1069
    %v1150 = vsel %vm63, %v1103, %v1070
    %v1151 = vsel %vm63, %v1107, %v1071
    %v1152 = vsel %vm63, %v1111, %v1072
    %v1153 = vsel %vm63, %v1115, %v1073
    %v1154 = vsel %vm63, %v1119, %v1074
    %v1155 = vsel %vm63, %v1123, %v1075
    %v1156 = vsel %vm63, %v1127, %v1076
    %v1157 = vsel %vm63, %v1131, %v1077
    %v1158 = vsel %vm63, %v1135, %v1078
    %v1159 = vsel %vm63, %v1139, %v1079
    %v1160 = vsel %vm63, %v1143, %v1080
    %1161 = vset.pattern.permute.xlu0 13
    %1162 = vperm.xlu0 %1161, %v34
    %v1163 = vpop.permute.xlu0 %1162
    %1165 = vset.pattern.permute.xlu0 13
    %1166 = vperm.xlu0 %1165, %v35
    %v1167 = vpop.permute.xlu0 %1166
    %1169 = vset.pattern.permute.xlu0 13
    %1170 = vperm.xlu0 %1169, %v36
    %v1171 = vpop.permute.xlu0 %1170
    %1173 = vset.pattern.permute.xlu0 13
    %1174 = vperm.xlu0 %1173, %v37
    %v1175 = vpop.permute.xlu0 %1174
    %1177 = vset.pattern.permute.xlu0 13
    %1178 = vperm.xlu0 %1177, %v38
    %v1179 = vpop.permute.xlu0 %1178
    %1181 = vset.pattern.permute.xlu0 13
    %1182 = vperm.xlu0 %1181, %v39
    %v1183 = vpop.permute.xlu0 %1182
    %1185 = vset.pattern.permute.xlu0 13
    %1186 = vperm.xlu0 %1185, %v40
    %v1187 = vpop.permute.xlu0 %1186
    %1189 = vset.pattern.permute.xlu0 13
    %1190 = vperm.xlu0 %1189, %v41
    %v1191 = vpop.permute.xlu0 %1190
    %1193 = vset.pattern.permute.xlu0 13
    %1194 = vperm.xlu0 %1193, %v42
    %v1195 = vpop.permute.xlu0 %1194
    %1197 = vset.pattern.permute.xlu0 13
    %1198 = vperm.xlu0 %1197, %v43
    %v1199 = vpop.permute.xlu0 %1198
    %1201 = vset.pattern.permute.xlu0 13
    %1202 = vperm.xlu0 %1201, %v44
    %v1203 = vpop.permute.xlu0 %1202
    %1205 = vset.pattern.permute.xlu0 13
    %1206 = vperm.xlu0 %1205, %v45
    %v1207 = vpop.permute.xlu0 %1206
    %1209 = vset.pattern.permute.xlu0 13
    %1210 = vperm.xlu0 %1209, %v46
    %v1211 = vpop.permute.xlu0 %1210
    %1213 = vset.pattern.permute.xlu0 13
    %1214 = vperm.xlu0 %1213, %v47
    %v1215 = vpop.permute.xlu0 %1214
    %1217 = vset.pattern.permute.xlu0 13
    %1218 = vperm.xlu0 %1217, %v48
    %v1219 = vpop.permute.xlu0 %1218
    %1221 = vset.pattern.permute.xlu0 13
    %1222 = vperm.xlu0 %1221, %v49
    %v1223 = vpop.permute.xlu0 %1222
    %v1225 = vsel %vm66, %v1163, %v1145
    %v1226 = vsel %vm66, %v1167, %v1146
    %v1227 = vsel %vm66, %v1171, %v1147
    %v1228 = vsel %vm66, %v1175, %v1148
    %v1229 = vsel %vm66, %v1179, %v1149
    %v1230 = vsel %vm66, %v1183, %v1150
    %v1231 = vsel %vm66, %v1187, %v1151
    %v1232 = vsel %vm66, %v1191, %v1152
    %v1233 = vsel %vm66, %v1195, %v1153
    %v1234 = vsel %vm66, %v1199, %v1154
    %v1235 = vsel %vm66, %v1203, %v1155
    %v1236 = vsel %vm66, %v1207, %v1156
    %v1237 = vsel %vm66, %v1211, %v1157
    %v1238 = vsel %vm66, %v1215, %v1158
    %v1239 = vsel %vm66, %v1219, %v1159
    %v1240 = vsel %vm66, %v1223, %v1160
    %1241 = vset.pattern.permute.xlu0 14
    %1242 = vperm.xlu0 %1241, %v34
    %v1243 = vpop.permute.xlu0 %1242
    %1245 = vset.pattern.permute.xlu0 14
    %1246 = vperm.xlu0 %1245, %v35
    %v1247 = vpop.permute.xlu0 %1246
    %1249 = vset.pattern.permute.xlu0 14
    %1250 = vperm.xlu0 %1249, %v36
    %v1251 = vpop.permute.xlu0 %1250
    %1253 = vset.pattern.permute.xlu0 14
    %1254 = vperm.xlu0 %1253, %v37
    %v1255 = vpop.permute.xlu0 %1254
    %1257 = vset.pattern.permute.xlu0 14
    %1258 = vperm.xlu0 %1257, %v38
    %v1259 = vpop.permute.xlu0 %1258
    %1261 = vset.pattern.permute.xlu0 14
    %1262 = vperm.xlu0 %1261, %v39
    %v1263 = vpop.permute.xlu0 %1262
    %1265 = vset.pattern.permute.xlu0 14
    %1266 = vperm.xlu0 %1265, %v40
    %v1267 = vpop.permute.xlu0 %1266
    %1269 = vset.pattern.permute.xlu0 14
    %1270 = vperm.xlu0 %1269, %v41
    %v1271 = vpop.permute.xlu0 %1270
    %1273 = vset.pattern.permute.xlu0 14
    %1274 = vperm.xlu0 %1273, %v42
    %v1275 = vpop.permute.xlu0 %1274
    %1277 = vset.pattern.permute.xlu0 14
    %1278 = vperm.xlu0 %1277, %v43
    %v1279 = vpop.permute.xlu0 %1278
    %1281 = vset.pattern.permute.xlu0 14
    %1282 = vperm.xlu0 %1281, %v44
    %v1283 = vpop.permute.xlu0 %1282
    %1285 = vset.pattern.permute.xlu0 14
    %1286 = vperm.xlu0 %1285, %v45
    %v1287 = vpop.permute.xlu0 %1286
    %1289 = vset.pattern.permute.xlu0 14
    %1290 = vperm.xlu0 %1289, %v46
    %v1291 = vpop.permute.xlu0 %1290
    %1293 = vset.pattern.permute.xlu0 14
    %1294 = vperm.xlu0 %1293, %v47
    %v1295 = vpop.permute.xlu0 %1294
    %1297 = vset.pattern.permute.xlu0 14
    %1298 = vperm.xlu0 %1297, %v48
    %v1299 = vpop.permute.xlu0 %1298
    %1301 = vset.pattern.permute.xlu0 14
    %1302 = vperm.xlu0 %1301, %v49
    %v1303 = vpop.permute.xlu0 %1302
    %v1305 = vsel %vm69, %v1243, %v1225
    %v1306 = vsel %vm69, %v1247, %v1226
    %v1307 = vsel %vm69, %v1251, %v1227
    %v1308 = vsel %vm69, %v1255, %v1228
    %v1309 = vsel %vm69, %v1259, %v1229
    %v1310 = vsel %vm69, %v1263, %v1230
    %v1311 = vsel %vm69, %v1267, %v1231
    %v1312 = vsel %vm69, %v1271, %v1232
    %v1313 = vsel %vm69, %v1275, %v1233
    %v1314 = vsel %vm69, %v1279, %v1234
    %v1315 = vsel %vm69, %v1283, %v1235
    %v1316 = vsel %vm69, %v1287, %v1236
    %v1317 = vsel %vm69, %v1291, %v1237
    %v1318 = vsel %vm69, %v1295, %v1238
    %v1319 = vsel %vm69, %v1299, %v1239
    %v1320 = vsel %vm69, %v1303, %v1240
    %1321 = vset.pattern.permute.xlu0 15
    %1322 = vperm.xlu0 %1321, %v34
    %v1323 = vpop.permute.xlu0 %1322
    %1325 = vset.pattern.permute.xlu0 15
    %1326 = vperm.xlu0 %1325, %v35
    %v1327 = vpop.permute.xlu0 %1326
    %1329 = vset.pattern.permute.xlu0 15
    %1330 = vperm.xlu0 %1329, %v36
    %v1331 = vpop.permute.xlu0 %1330
    %1333 = vset.pattern.permute.xlu0 15
    %1334 = vperm.xlu0 %1333, %v37
    %v1335 = vpop.permute.xlu0 %1334
    %1337 = vset.pattern.permute.xlu0 15
    %1338 = vperm.xlu0 %1337, %v38
    %v1339 = vpop.permute.xlu0 %1338
    %1341 = vset.pattern.permute.xlu0 15
    %1342 = vperm.xlu0 %1341, %v39
    %v1343 = vpop.permute.xlu0 %1342
    %1345 = vset.pattern.permute.xlu0 15
    %1346 = vperm.xlu0 %1345, %v40
    %v1347 = vpop.permute.xlu0 %1346
    %1349 = vset.pattern.permute.xlu0 15
    %1350 = vperm.xlu0 %1349, %v41
    %v1351 = vpop.permute.xlu0 %1350
    %1353 = vset.pattern.permute.xlu0 15
    %1354 = vperm.xlu0 %1353, %v42
    %v1355 = vpop.permute.xlu0 %1354
    %1357 = vset.pattern.permute.xlu0 15
    %1358 = vperm.xlu0 %1357, %v43
    %v1359 = vpop.permute.xlu0 %1358
    %1361 = vset.pattern.permute.xlu0 15
    %1362 = vperm.xlu0 %1361, %v44
    %v1363 = vpop.permute.xlu0 %1362
    %1365 = vset.pattern.permute.xlu0 15
    %1366 = vperm.xlu0 %1365, %v45
    %v1367 = vpop.permute.xlu0 %1366
    %1369 = vset.pattern.permute.xlu0 15
    %1370 = vperm.xlu0 %1369, %v46
    %v1371 = vpop.permute.xlu0 %1370
    %1373 = vset.pattern.permute.xlu0 15
    %1374 = vperm.xlu0 %1373, %v47
    %v1375 = vpop.permute.xlu0 %1374
    %1377 = vset.pattern.permute.xlu0 15
    %1378 = vperm.xlu0 %1377, %v48
    %v1379 = vpop.permute.xlu0 %1378
    %1381 = vset.pattern.permute.xlu0 15
    %1382 = vperm.xlu0 %1381, %v49
    %v1383 = vpop.permute.xlu0 %1382
    %v1385 = vsel %vm72, %v1323, %v1305
    %v1386 = vsel %vm72, %v1327, %v1306
    %v1387 = vsel %vm72, %v1331, %v1307
    %v1388 = vsel %vm72, %v1335, %v1308
    %v1389 = vsel %vm72, %v1339, %v1309
    %v1390 = vsel %vm72, %v1343, %v1310
    %v1391 = vsel %vm72, %v1347, %v1311
    %v1392 = vsel %vm72, %v1351, %v1312
    %v1393 = vsel %vm72, %v1355, %v1313
    %v1394 = vsel %vm72, %v1359, %v1314
    %v1395 = vsel %vm72, %v1363, %v1315
    %v1396 = vsel %vm72, %v1367, %v1316
    %v1397 = vsel %vm72, %v1371, %v1317
    %v1398 = vsel %vm72, %v1375, %v1318
    %v1399 = vsel %vm72, %v1379, %v1319
    %v1400 = vsel %vm72, %v1383, %v1320
    %v1401 = vmul.f32 %v18, %v1393
    %v1402 = vmul.f32 %v19, %v1394
    %v1403 = vmul.f32 %v20, %v1395
    %v1404 = vmul.f32 %v21, %v1396
    %v1405 = vmul.f32 %v22, %v1397
    %v1406 = vmul.f32 %v23, %v1398
    %v1407 = vmul.f32 %v24, %v1399
    %v1408 = vmul.f32 %v25, %v1400
    %v1409 = vmul.f32 %v26, %v1385
    %v1410 = vmul.f32 %v27, %v1386
    %v1411 = vmul.f32 %v28, %v1387
    %v1412 = vmul.f32 %v29, %v1388
    %v1413 = vmul.f32 %v30, %v1389
    %v1414 = vmul.f32 %v31, %v1390
    %v1415 = vmul.f32 %v32, %v1391
    %v1416 = vmul.f32 %v33, %v1392
    %v1417 = vadd.f32 %v1401, %v1409
    %v1418 = vadd.f32 %v1402, %v1410
    %v1419 = vadd.f32 %v1403, %v1411
    %v1420 = vadd.f32 %v1404, %v1412
    %v1421 = vadd.f32 %v1405, %v1413
    %v1422 = vadd.f32 %v1406, %v1414
    %v1423 = vadd.f32 %v1407, %v1415
    %v1424 = vadd.f32 %v1408, %v1416
    %1425 = vst [vmem:[#allocation2 + $0x8] sm:$0xff] %v1417
    %1426 = vst [vmem:[#allocation2 + $0x18] sm:$0xff] %v1418
    %1427 = vst [vmem:[#allocation2 + $0x28] sm:$0xff] %v1419
    %1428 = vst [vmem:[#allocation2 + $0x38] sm:$0xff] %v1420
    %1429 = vst [vmem:[#allocation2 + $0x48] sm:$0xff] %v1421
    %1430 = vst [vmem:[#allocation2 + $0x58] sm:$0xff] %v1422
    %1431 = vst [vmem:[#allocation2 + $0x68] sm:$0xff] %v1423
    %1432 = vst [vmem:[#allocation2 + $0x78] sm:$0xff] %v1424
    %v1433 = vmul.f32 %v26, %v1393
    %v1434 = vmul.f32 %v27, %v1394
    %v1435 = vmul.f32 %v28, %v1395
    %v1436 = vmul.f32 %v29, %v1396
    %v1437 = vmul.f32 %v30, %v1397
    %v1438 = vmul.f32 %v31, %v1398
    %v1439 = vmul.f32 %v32, %v1399
    %v1440 = vmul.f32 %v33, %v1400
    %v1441 = vmul.f32 %v18, %v1385
    %v1442 = vmul.f32 %v19, %v1386
    %v1443 = vmul.f32 %v20, %v1387
    %v1444 = vmul.f32 %v21, %v1388
    %v1445 = vmul.f32 %v22, %v1389
    %v1446 = vmul.f32 %v23, %v1390
    %v1447 = vmul.f32 %v24, %v1391
    %v1448 = vmul.f32 %v25, %v1392
    %v1449 = vsub.f32 %v1433, %v1441
    %v1450 = vsub.f32 %v1434, %v1442
    %v1451 = vsub.f32 %v1435, %v1443
    %v1452 = vsub.f32 %v1436, %v1444
    %v1453 = vsub.f32 %v1437, %v1445
    %v1454 = vsub.f32 %v1438, %v1446
    %v1455 = vsub.f32 %v1439, %v1447
    %v1456 = vsub.f32 %v1440, %v1448
    %1457 = vst [vmem:[#allocation2 + $0x88] sm:$0xff] %v1449
    %1458 = vst [vmem:[#allocation2 + $0x98] sm:$0xff] %v1450
    %1459 = vst [vmem:[#allocation2 + $0xa8] sm:$0xff] %v1451
    %1460 = vst [vmem:[#allocation2 + $0xb8] sm:$0xff] %v1452
    %1461 = vst [vmem:[#allocation2 + $0xc8] sm:$0xff] %v1453
    %1462 = vst [vmem:[#allocation2 + $0xd8] sm:$0xff] %v1454
    %1463 = vst [vmem:[#allocation2 + $0xe8] sm:$0xff] %v1455
    %1464 = vst [vmem:[#allocation2 + $0xf8] sm:$0xff] %v1456
    // Predicated region
    $region18: #{tpu_custom_call.1} parent=1 // pred_check
      _
    $region19: #{tpu_custom_call.1} parent=1 // pred_check_branch
      %1466 = sbr.rel (0) target = $region21
    $region20: #{tpu_custom_call.1} parent=1 // pred_region
      %s1468 = ssub.s32 4096, 4096
      %1469 = vsyncadd [#allocation3], %s1468
      %s1470 = sshll.u32 [#allocation2], 4
      %s1471 = int_to_ptr.vmem [resolvable:$true] %s1470
      %1476 = dma.vmem_to_hbm [thread:$0]  %s1471, 4096, %s4, [#allocation3], 256, 256, 16
    $region21: #{tpu_custom_call.1} parent=1 // pred_fallthru
      _
    // Predicated region
    $region22: #{tpu_custom_call.1} parent=1 // pred_check
      _
    $region23: #{tpu_custom_call.1} parent=1 // pred_check_branch
      %1478 = sbr.rel (0) target = $region25
    $region24: #{tpu_custom_call.1} parent=1 // pred_region
      %1479 = dma.done [#allocation3], 4096
    $region25: #{tpu_custom_call.1} parent=1 // pred_fallthru
      _
    %1480 = vsyncpa [#allocation3], 1

</llo_original>
